<compile_context>
chip_gen: v6e
topology: v6e:2x2x1
jax: 0.10.0
libtpu: 0.0.40
codegen_flags: <defaults>
</compile_context>

<pallas_src>
import functools

import numpy as np
import jax
import jax.numpy as jnp
from jax import lax
from jax.experimental import pallas as pl
from jax.experimental.pallas import tpu as pltpu


def _vmem():
    return pl.BlockSpec(memory_space=pltpu.MemorySpace.VMEM)


# ---------------------------------------------------------------------------
# Fused kernel: conv5x5 + maxpool2x2 + bidirectional LSTM + BatchNorm + dense
# ---------------------------------------------------------------------------
def sparnet_kernel(x_ref, convm_ref, biaspad_ref, wx_ref, whbd_ref, bcat_ref,
                   c0_ref, dmask_ref, bnmask_ref, wy_ref, out_ref,
                   conv_scr, feat_scr, zx_scr, y_scr, *, B, Bp, H, D, T):
    # x_ref      : (H*Bp, 5*(W+4))  im2col of the zero-padded image
    #              row = img_row*Bp + batch, col = dy*(W+4) + padded_col
    # convm_ref  : (5*(W+4), 2*D)   conv taps scattered onto pool-window cols
    # biaspad_ref: (1, 2*D)         conv bias, -1e30 on out-of-range pool cols
    # wx_ref     : (D, 8*D)         pooled feats -> gates (both dirs, dense)
    # whbd_ref   : (2*D, 8*D)       [h1 | h2] -> gates (block structured)
    # bcat_ref   : (1, 8*D)         gate biases  layout [i1 i2 f1 f2 o1 o2 g1 g2]
    # c0_ref     : (1, 2*D)         [c1 | c2] initial cell state
    # dmask_ref  : (1, 8*D)         1.0 on dir-1 gate lanes, 0.0 on dir-2 lanes
    # bnmask_ref : (T*Bp, 2*D)      1.0 on real batch rows, 0.0 on padded rows
    # wy_ref     : (2*D, 128)       dense_y weights (bf16), zero-padded 95->128
    # out_ref    : (T*Bp, 128)
    f32 = jnp.float32
    D2, D6 = 2 * D, 6 * D

    # --- 5x5 conv (pad 2) + pooling-column scatter: ONE MXU matmul -----------
    conv_scr[...] = jnp.dot(x_ref[...], convm_ref[...],
                            preferred_element_type=f32) + biaspad_ref[...]

    # --- max-pool (kernel 2, stride 2, padding 1): rows, then column halves --
    for p in range(T):                                    # static, small T
        r0, r1 = 2 * p - 1, 2 * p
        if r0 < 0:
            rm = conv_scr[pl.ds(r1 * Bp, Bp), :]
        elif r1 >= H:
            rm = conv_scr[pl.ds(r0 * Bp, Bp), :]
        else:
            rm = jnp.maximum(conv_scr[pl.ds(r0 * Bp, Bp), :],
                             conv_scr[pl.ds(r1 * Bp, Bp), :])
        feat_scr[pl.ds(p * Bp, Bp), :] = jnp.maximum(rm[:, :D], rm[:, D:])

    # --- input->gate projection (both directions), hoisted out of the loop ---
    zx_scr[...] = jnp.dot(feat_scr[...], wx_ref[...],
                          preferred_element_type=f32) + bcat_ref[...]

    # --- fused bidirectional LSTM recurrence ----------------------------------
    whbd = whbd_ref[...]                                  # (2D, 8D)
    dir1 = dmask_ref[...] != 0.0                          # dir-1 gate lanes
    c0 = jnp.broadcast_to(c0_ref[...], (Bp, D2))          # [c1 | c2]
    h0 = jnp.tanh(c0)

    def step(t, carry):
        c, h = carry
        fi = pl.multiple_of(t * Bp, Bp)                   # forward time  t
        bi = pl.multiple_of((T - 1 - t) * Bp, Bp)         # backward time T-1-t
        zf = zx_scr[pl.ds(fi, Bp), :]
        zb = zx_scr[pl.ds(bi, Bp), :]
        z = jnp.where(dir1, zf, zb) + jnp.dot(h, whbd,
                                              preferred_element_type=f32)
        s = jax.nn.sigmoid(z[:, :D6])                     # [i1 i2 f1 f2 o1 o2]
        g = jnp.tanh(z[:, D6:])                           # [g1 g2]
        c = s[:, :D2] * g + s[:, D2:2 * D2] * c
        h = s[:, 2 * D2:D6] * jnp.tanh(c)
        y_scr[pl.ds(fi, Bp), :D] = h[:, :D]               # dir-1 hidden @ t
        y_scr[pl.ds(bi, Bp), D:] = h[:, D:]               # dir-2 hidden @ T-1-t
        return c, h

    lax.fori_loop(0, T, step, (c0, h0), unroll=True)
    # TODO(synk): hold whbd resident in the MXU across the T serial steps via
    # pltpu.matmul_push_rhs / matmul_acc_lhs / matmul_pop.

    # --- BatchNorm1d (training batch stats, affine=False) + dense_y ----------
    y = y_scr[...]
    m = bnmask_ref[...]                                   # exclude padded rows
    inv_n = 1.0 / float(T * B)
    mean = jnp.sum(y * m, axis=0, keepdims=True) * inv_n
    d = (y - mean) * m
    var = jnp.sum(d * d, axis=0, keepdims=True) * inv_n
    ynorm = (y - mean) * lax.rsqrt(var + 1e-5)
    out_ref[...] = jnp.dot(ynorm.astype(jnp.bfloat16), wy_ref[...],
                           preferred_element_type=f32)


# ---------------------------------------------------------------------------
# Parameter init (deterministic, shapes follow SparNetLSTM.__init__)
# ---------------------------------------------------------------------------
def init_params(key, dims=32):
    C = int(round(dims / 16.0))
    k = jax.random.split(key, 8)
    params = {}
    params["conv_w"] = jax.random.normal(k[0], (C, 5, 5), jnp.float32) * 0.2
    params["conv_b"] = jax.random.normal(k[1], (C,), jnp.float32) * 0.1

    def lstm_dir(kd):
        ks = jax.random.split(kd, 8)
        wx_l, wh_l, b_l = [], [], []
        for gi, name in enumerate(("i", "f", "o", "g")):
            Wg = jax.random.normal(ks[2 * gi], (dims, 2 * dims),
                                   jnp.float32) / np.sqrt(2 * dims)
            bg = jax.random.normal(ks[2 * gi + 1], (dims,), jnp.float32) * 0.1
            if name == "f":
                bg = bg + 1.0                 # dense_f*.bias.add_(1.0)
            # torch Linear: out = tt @ W.T ; tt = [h, feat]
            wh_l.append(Wg[:, :dims].T)       # hidden part
            wx_l.append(Wg[:, dims:].T)       # feature part
            b_l.append(bg)
        return (jnp.concatenate(wx_l, axis=1),
                jnp.concatenate(wh_l, axis=1),
                jnp.concatenate(b_l).reshape(1, 4 * dims))

    params["wx1"], params["wh1"], params["b1"] = lstm_dir(k[2])
    params["wx2"], params["wh2"], params["b2"] = lstm_dir(k[3])
    params["c1"] = jax.random.uniform(k[4], (1, dims), jnp.float32)
    params["c2"] = jax.random.uniform(k[5], (1, dims), jnp.float32)
    Wy = jax.random.normal(k[6], (95, 2 * dims), jnp.float32) / np.sqrt(2 * dims)
    params["wy1"] = Wy[:, :dims].T
    params["wy2"] = Wy[:, dims:].T
    return params


# ---------------------------------------------------------------------------
# One-time parameter repacking into kernel operand layout (cached outside the
# per-call path).
# ---------------------------------------------------------------------------
def pack_params(params, B, H, W):
    f32 = jnp.float32
    C = params["conv_w"].shape[0]
    D = params["c1"].shape[1]
    Wp = W // 2 + 1
    T = H // 2 + 1
    assert C * Wp == D, "conv channels * pooled width must equal dims"
    Bp = ((B + 7) // 8) * 8                    # sublane-aligned batch

    # conv taps scattered onto pooling-window columns, flattened to one RHS
    P = np.zeros((5, W + 4, 2, Wp), np.float32)
    pad_pen = np.zeros((2, 1, Wp), np.float32)
    for half in range(2):
        for q in range(Wp):
            col = 2 * q - 1 + half
            if 0 <= col < W:
                for dx in range(5):
                    P[dx, col + dx, half, q] = 1.0
            else:
                pad_pen[half, 0, q] = -1e30
    convm = jnp.einsum("cyx,xwhq->ywhcq", params["conv_w"].astype(f32),
                       jnp.asarray(P))
    convm = convm.reshape(5 * (W + 4), 2 * D)
    biaspad = (jnp.tile(jnp.repeat(params["conv_b"].astype(f32), Wp), 2)
               + jnp.asarray(np.tile(pad_pen, (1, C, 1)).reshape(-1))
               ).reshape(1, 2 * D)

    # gate-major layout [i1 i2 f1 f2 o1 o2 g1 g2]
    def interleave_cols(w1, w2):
        return jnp.concatenate(
            [jnp.concatenate([w1[:, g * D:(g + 1) * D],
                              w2[:, g * D:(g + 1) * D]], axis=1)
             for g in range(4)], axis=1)

    wx = interleave_cols(params["wx1"], params["wx2"])            # (D, 8D) dense
    Z = jnp.zeros((D, D), f32)
    whbd = jnp.concatenate(
        [jnp.concatenate(
            [jnp.concatenate([params["wh1"][:, g * D:(g + 1) * D], Z], axis=0),
             jnp.concatenate([Z, params["wh2"][:, g * D:(g + 1) * D]], axis=0)],
            axis=1)
         for g in range(4)], axis=1)                              # (2D, 8D)
    bcat = interleave_cols(params["b1"], params["b2"])            # (1, 8D)
    c0 = jnp.concatenate([params["c1"], params["c2"]], axis=1)    # (1, 2D)

    lane = np.arange(8 * D)
    dmask = jnp.asarray(((lane % (2 * D)) < D).astype(np.float32)
                        ).reshape(1, 8 * D)
    rowmask = (np.arange(Bp) < B).astype(np.float32)
    bnmask = jnp.asarray(np.tile(rowmask[:, None], (T, 2 * D)))   # (T*Bp, 2D)

    wy = jnp.concatenate([params["wy1"], params["wy2"]], axis=0)  # (2D, 95)
    n_out = wy.shape[1]
    assert n_out <= 128
    wy = jnp.pad(wy, ((0, 0), (0, 128 - n_out))).astype(jnp.bfloat16)

    return dict(convm=convm, biaspad=biaspad, wx=wx, whbd=whbd, bcat=bcat,
                c0=c0, dmask=dmask, bnmask=bnmask, wy=wy,
                B=B, Bp=Bp, H=H, W=W, D=D, T=T, n_out=n_out)


# ---------------------------------------------------------------------------
# Forward wrapper: im2col layout plumbing + one pallas_call
# ---------------------------------------------------------------------------
def sparnet_lstm_forward(x, packed):
    B, Bp, H, W = packed["B"], packed["Bp"], packed["H"], packed["W"]
    D, T, n_out = packed["D"], packed["T"], packed["n_out"]
    f32 = jnp.float32
    assert x.shape == (B, H, W)

    # padded image -> im2col LHS: row = img_row*Bp + batch, col = dy*(W+4)+wi
    xt = jnp.transpose(x.astype(f32), (1, 0, 2))                  # (H, B, W)
    xt = jnp.pad(xt, ((2, 2), (0, Bp - B), (2, 2)))               # (H+4, Bp, W+4)
    x_im2col = jnp.concatenate(
        [xt[dy:dy + H].reshape(H * Bp, W + 4) for dy in range(5)], axis=1)

    kernel = functools.partial(sparnet_kernel, B=B, Bp=Bp, H=H, D=D, T=T)
    out2d = pl.pallas_call(
        kernel,
        out_shape=jax.ShapeDtypeStruct((T * Bp, 128), f32),
        in_specs=[_vmem()] * 10,
        out_specs=_vmem(),
        scratch_shapes=[
            pltpu.VMEM((H * Bp, 2 * D), f32),     # conv + pool-column gather
            pltpu.VMEM((T * Bp, D), f32),         # pooled features
            pltpu.VMEM((T * Bp, 8 * D), f32),     # hoisted input->gate proj
            pltpu.VMEM((T * Bp, 2 * D), f32),     # interleaved hidden states
        ],
    )(x_im2col, packed["convm"], packed["biaspad"], packed["wx"],
      packed["whbd"], packed["bcat"], packed["c0"], packed["dmask"],
      packed["bnmask"], packed["wy"])

    out = out2d.reshape(T, Bp, 128)[:, :B, :n_out]                # (T, B, 95)
    return jnp.transpose(out, (1, 0, 2))                          # (B, T, 95)


# ---------------------------------------------------------------------------
# Pure-JAX reference (direct translation of the PyTorch forward) for checking
# ---------------------------------------------------------------------------
def sparnet_reference(x, params):
    B, H, W = x.shape
    dims = params["c1"].shape[1]
    hi = lax.Precision.HIGHEST
    xf = x.astype(jnp.float32)[:, None, :, :]                     # (B,1,H,W)
    t = lax.conv_general_dilated(
        xf, params["conv_w"][:, None, :, :], window_strides=(1, 1),
        padding=((2, 2), (2, 2)),
        dimension_numbers=("NCHW", "OIHW", "NCHW"), precision=hi)
    t = t + params["conv_b"][None, :, None, None]
    t = lax.reduce_window(t, -jnp.inf, lax.max, (1, 1, 2, 2), (1, 1, 2, 2),
                          ((0, 0), (0, 0), (1, 1), (1, 1)))
    Tn = t.shape[2]

    def run_dir(wx, wh, b, c0, order):
        c = jnp.broadcast_to(c0, (B, dims))
        h = jnp.tanh(c)
        ys = {}
        for col in order:
            feat = t[:, :, col, :].reshape(B, -1)
            z = (jnp.dot(feat, wx, precision=hi)
                 + jnp.dot(h, wh, precision=hi) + b)
            i = jax.nn.sigmoid(z[:, :dims])
            f = jax.nn.sigmoid(z[:, dims:2 * dims])
            o = jax.nn.sigmoid(z[:, 2 * dims:3 * dims])
            g = jnp.tanh(z[:, 3 * dims:])
            c = i * g + f * c
            h = o * jnp.tanh(c)
            ys[col] = h
        return jnp.stack([ys[col] for col in range(Tn)], axis=1)  # (B, T, dims)

    y1 = run_dir(params["wx1"], params["wh1"], params["b1"], params["c1"],
                 range(Tn))
    y2 = run_dir(params["wx2"], params["wh2"], params["b2"], params["c2"],
                 range(Tn - 1, -1, -1))
    y = jnp.concatenate([y1, y2], axis=2).reshape(B * Tn, 2 * dims)
    m = jnp.mean(y, axis=0, keepdims=True)
    v = jnp.mean((y - m) ** 2, axis=0, keepdims=True)
    yn = ((y - m) / jnp.sqrt(v + 1e-5)).reshape(B, Tn, 2 * dims)
    wy = jnp.concatenate([params["wy1"], params["wy2"]], axis=0)
    return jnp.dot(yn, wy, precision=hi)                          # (B, T, 95)


if __name__ == "__main__":
    key = jax.random.PRNGKey(0)
    k_x, k_p = jax.random.split(key)

    dims = 32                      # small config: C = round(dims/16) = 2 channels
    B, H, W = 2, 14, 30            # pooled: T = 8 timesteps, Wp = 16 -> D = 32

    params = init_params(k_p, dims=dims)
    x = jax.random.normal(k_x, (B, H, W), jnp.float32)

    packed = pack_params(params, B, H, W)          # one-time parameter repack
    fwd = jax.jit(functools.partial(sparnet_lstm_forward, packed=packed))
    out = fwd(x)
    jax.block_until_ready(out)

    assert out.shape == (B, H // 2 + 1, 95), out.shape
    assert bool(jnp.all(jnp.isfinite(out)))

    ref = sparnet_reference(x, params)
    np.testing.assert_allclose(np.asarray(out), np.asarray(ref),
                               rtol=1e-2, atol=1e-2)
    print("KERNEL_OK")
</pallas_src>

<mosaic_0001>
module attributes {stable_mosaic.version = 11 : i64} {
  func.func @sparnet_kernel(%arg0: memref<112x170xf32, #tpu.memory_space<vmem>>, %arg1: memref<170x64xf32, #tpu.memory_space<vmem>>, %arg2: memref<1x64xf32, #tpu.memory_space<vmem>>, %arg3: memref<32x256xf32, #tpu.memory_space<vmem>>, %arg4: memref<64x256xf32, #tpu.memory_space<vmem>>, %arg5: memref<1x256xf32, #tpu.memory_space<vmem>>, %arg6: memref<1x64xf32, #tpu.memory_space<vmem>>, %arg7: memref<1x256xf32, #tpu.memory_space<vmem>>, %arg8: memref<64x64xf32, #tpu.memory_space<vmem>>, %arg9: memref<64x128xbf16, #tpu.memory_space<vmem>>, %arg10: memref<64x128xf32, #tpu.memory_space<vmem>>, %arg11: memref<112x64xf32, #tpu.memory_space<vmem>>, %arg12: memref<64x32xf32, #tpu.memory_space<vmem>>, %arg13: memref<64x256xf32, #tpu.memory_space<vmem>>, %arg14: memref<64x64xf32, #tpu.memory_space<vmem>>) attributes {dimension_semantics = [], scalar_prefetch = 0 : i64, scratch_operands = 4 : i64, tpu.core_type = #tpu.core_type<tc>} {
    %c0 = arith.constant 0 : index
    %c0_0 = arith.constant 0 : index
    %0 = vector.load %arg0[%c0, %c0_0] : memref<112x170xf32, #tpu.memory_space<vmem>>, vector<112x170xf32>
    %c0_1 = arith.constant 0 : index
    %c0_2 = arith.constant 0 : index
    %1 = vector.load %arg1[%c0_1, %c0_2] : memref<170x64xf32, #tpu.memory_space<vmem>>, vector<170x64xf32>
    %cst = arith.constant dense<0.000000e+00> : vector<112x64xf32>
    %2 = tpu.matmul %0, %1, %cst {dimension_numbers = #tpu.dot_dimension_numbers<[1], [0], [0], [1], [0, 0, 1, 1], [], []>} : vector<112x170xf32>, vector<170x64xf32>, vector<112x64xf32> -> vector<112x64xf32>
    %c0_3 = arith.constant 0 : index
    %c0_4 = arith.constant 0 : index
    %3 = vector.load %arg2[%c0_3, %c0_4] : memref<1x64xf32, #tpu.memory_space<vmem>>, vector<1x64xf32>
    %4 = vector.broadcast %3 : vector<1x64xf32> to vector<112x64xf32>
    %5 = arith.addf %2, %4 : vector<112x64xf32>
    %c0_5 = arith.constant 0 : index
    %c0_6 = arith.constant 0 : index
    %6 = vector.load %arg11[%c0_5, %c0_6] : memref<112x64xf32, #tpu.memory_space<vmem>>, vector<112x64xf32>
    tpu.vector_store %arg11[%c0_5, %c0_6], %5 {strides = array<i32>} : memref<112x64xf32, #tpu.memory_space<vmem>>, vector<112x64xf32>,
    %c0_7 = arith.constant 0 : index
    %c0_8 = arith.constant 0 : index
    %7 = vector.load %arg11[%c0_7, %c0_8] : memref<112x64xf32, #tpu.memory_space<vmem>>, vector<8x64xf32>
    %8 = vector.extract_strided_slice %7 {offsets = [0, 0], sizes = [8, 32], strides = [1, 1]} : vector<8x64xf32> to vector<8x32xf32>
    %9 = vector.extract_strided_slice %7 {offsets = [0, 32], sizes = [8, 32], strides = [1, 1]} : vector<8x64xf32> to vector<8x32xf32>
    %10 = arith.maximumf %8, %9 : vector<8x32xf32>
    %c0_9 = arith.constant 0 : index
    %c0_10 = arith.constant 0 : index
    %11 = vector.load %arg12[%c0_9, %c0_10] : memref<64x32xf32, #tpu.memory_space<vmem>>, vector<8x32xf32>
    tpu.vector_store %arg12[%c0_9, %c0_10], %10 {strides = array<i32>} : memref<64x32xf32, #tpu.memory_space<vmem>>, vector<8x32xf32>,
    %c8 = arith.constant 8 : index
    %c0_11 = arith.constant 0 : index
    %12 = vector.load %arg11[%c8, %c0_11] : memref<112x64xf32, #tpu.memory_space<vmem>>, vector<8x64xf32>
    %c16 = arith.constant 16 : index
    %c0_12 = arith.constant 0 : index
    %13 = vector.load %arg11[%c16, %c0_12] : memref<112x64xf32, #tpu.memory_space<vmem>>, vector<8x64xf32>
    %14 = arith.maximumf %12, %13 : vector<8x64xf32>
    %15 = vector.extract_strided_slice %14 {offsets = [0, 0], sizes = [8, 32], strides = [1, 1]} : vector<8x64xf32> to vector<8x32xf32>
    %16 = vector.extract_strided_slice %14 {offsets = [0, 32], sizes = [8, 32], strides = [1, 1]} : vector<8x64xf32> to vector<8x32xf32>
    %17 = arith.maximumf %15, %16 : vector<8x32xf32>
    %c8_13 = arith.constant 8 : index
    %c0_14 = arith.constant 0 : index
    %18 = vector.load %arg12[%c8_13, %c0_14] : memref<64x32xf32, #tpu.memory_space<vmem>>, vector<8x32xf32>
    tpu.vector_store %arg12[%c8_13, %c0_14], %17 {strides = array<i32>} : memref<64x32xf32, #tpu.memory_space<vmem>>, vector<8x32xf32>,
    %c24 = arith.constant 24 : index
    %c0_15 = arith.constant 0 : index
    %19 = vector.load %arg11[%c24, %c0_15] : memref<112x64xf32, #tpu.memory_space<vmem>>, vector<8x64xf32>
    %c32 = arith.constant 32 : index
    %c0_16 = arith.constant 0 : index
    %20 = vector.load %arg11[%c32, %c0_16] : memref<112x64xf32, #tpu.memory_space<vmem>>, vector<8x64xf32>
    %21 = arith.maximumf %19, %20 : vector<8x64xf32>
    %22 = vector.extract_strided_slice %21 {offsets = [0, 0], sizes = [8, 32], strides = [1, 1]} : vector<8x64xf32> to vector<8x32xf32>
    %23 = vector.extract_strided_slice %21 {offsets = [0, 32], sizes = [8, 32], strides = [1, 1]} : vector<8x64xf32> to vector<8x32xf32>
    %24 = arith.maximumf %22, %23 : vector<8x32xf32>
    %c16_17 = arith.constant 16 : index
    %c0_18 = arith.constant 0 : index
    %25 = vector.load %arg12[%c16_17, %c0_18] : memref<64x32xf32, #tpu.memory_space<vmem>>, vector<8x32xf32>
    tpu.vector_store %arg12[%c16_17, %c0_18], %24 {strides = array<i32>} : memref<64x32xf32, #tpu.memory_space<vmem>>, vector<8x32xf32>,
    %c40 = arith.constant 40 : index
    %c0_19 = arith.constant 0 : index
    %26 = vector.load %arg11[%c40, %c0_19] : memref<112x64xf32, #tpu.memory_space<vmem>>, vector<8x64xf32>
    %c48 = arith.constant 48 : index
    %c0_20 = arith.constant 0 : index
    %27 = vector.load %arg11[%c48, %c0_20] : memref<112x64xf32, #tpu.memory_space<vmem>>, vector<8x64xf32>
    %28 = arith.maximumf %26, %27 : vector<8x64xf32>
    %29 = vector.extract_strided_slice %28 {offsets = [0, 0], sizes = [8, 32], strides = [1, 1]} : vector<8x64xf32> to vector<8x32xf32>
    %30 = vector.extract_strided_slice %28 {offsets = [0, 32], sizes = [8, 32], strides = [1, 1]} : vector<8x64xf32> to vector<8x32xf32>
    %31 = arith.maximumf %29, %30 : vector<8x32xf32>
    %c24_21 = arith.constant 24 : index
    %c0_22 = arith.constant 0 : index
    %32 = vector.load %arg12[%c24_21, %c0_22] : memref<64x32xf32, #tpu.memory_space<vmem>>, vector<8x32xf32>
    tpu.vector_store %arg12[%c24_21, %c0_22], %31 {strides = array<i32>} : memref<64x32xf32, #tpu.memory_space<vmem>>, vector<8x32xf32>,
    %c56 = arith.constant 56 : index
    %c0_23 = arith.constant 0 : index
    %33 = vector.load %arg11[%c56, %c0_23] : memref<112x64xf32, #tpu.memory_space<vmem>>, vector<8x64xf32>
    %c64 = arith.constant 64 : index
    %c0_24 = arith.constant 0 : index
    %34 = vector.load %arg11[%c64, %c0_24] : memref<112x64xf32, #tpu.memory_space<vmem>>, vector<8x64xf32>
    %35 = arith.maximumf %33, %34 : vector<8x64xf32>
    %36 = vector.extract_strided_slice %35 {offsets = [0, 0], sizes = [8, 32], strides = [1, 1]} : vector<8x64xf32> to vector<8x32xf32>
    %37 = vector.extract_strided_slice %35 {offsets = [0, 32], sizes = [8, 32], strides = [1, 1]} : vector<8x64xf32> to vector<8x32xf32>
    %38 = arith.maximumf %36, %37 : vector<8x32xf32>
    %c32_25 = arith.constant 32 : index
    %c0_26 = arith.constant 0 : index
    %39 = vector.load %arg12[%c32_25, %c0_26] : memref<64x32xf32, #tpu.memory_space<vmem>>, vector<8x32xf32>
    tpu.vector_store %arg12[%c32_25, %c0_26], %38 {strides = array<i32>} : memref<64x32xf32, #tpu.memory_space<vmem>>, vector<8x32xf32>,
    %c72 = arith.constant 72 : index
    %c0_27 = arith.constant 0 : index
    %40 = vector.load %arg11[%c72, %c0_27] : memref<112x64xf32, #tpu.memory_space<vmem>>, vector<8x64xf32>
    %c80 = arith.constant 80 : index
    %c0_28 = arith.constant 0 : index
    %41 = vector.load %arg11[%c80, %c0_28] : memref<112x64xf32, #tpu.memory_space<vmem>>, vector<8x64xf32>
    %42 = arith.maximumf %40, %41 : vector<8x64xf32>
    %43 = vector.extract_strided_slice %42 {offsets = [0, 0], sizes = [8, 32], strides = [1, 1]} : vector<8x64xf32> to vector<8x32xf32>
    %44 = vector.extract_strided_slice %42 {offsets = [0, 32], sizes = [8, 32], strides = [1, 1]} : vector<8x64xf32> to vector<8x32xf32>
    %45 = arith.maximumf %43, %44 : vector<8x32xf32>
    %c40_29 = arith.constant 40 : index
    %c0_30 = arith.constant 0 : index
    %46 = vector.load %arg12[%c40_29, %c0_30] : memref<64x32xf32, #tpu.memory_space<vmem>>, vector<8x32xf32>
    tpu.vector_store %arg12[%c40_29, %c0_30], %45 {strides = array<i32>} : memref<64x32xf32, #tpu.memory_space<vmem>>, vector<8x32xf32>,
    %c88 = arith.constant 88 : index
    %c0_31 = arith.constant 0 : index
    %47 = vector.load %arg11[%c88, %c0_31] : memref<112x64xf32, #tpu.memory_space<vmem>>, vector<8x64xf32>
    %c96 = arith.constant 96 : index
    %c0_32 = arith.constant 0 : index
    %48 = vector.load %arg11[%c96, %c0_32] : memref<112x64xf32, #tpu.memory_space<vmem>>, vector<8x64xf32>
    %49 = arith.maximumf %47, %48 : vector<8x64xf32>
    %50 = vector.extract_strided_slice %49 {offsets = [0, 0], sizes = [8, 32], strides = [1, 1]} : vector<8x64xf32> to vector<8x32xf32>
    %51 = vector.extract_strided_slice %49 {offsets = [0, 32], sizes = [8, 32], strides = [1, 1]} : vector<8x64xf32> to vector<8x32xf32>
    %52 = arith.maximumf %50, %51 : vector<8x32xf32>
    %c48_33 = arith.constant 48 : index
    %c0_34 = arith.constant 0 : index
    %53 = vector.load %arg12[%c48_33, %c0_34] : memref<64x32xf32, #tpu.memory_space<vmem>>, vector<8x32xf32>
    tpu.vector_store %arg12[%c48_33, %c0_34], %52 {strides = array<i32>} : memref<64x32xf32, #tpu.memory_space<vmem>>, vector<8x32xf32>,
    %c104 = arith.constant 104 : index
    %c0_35 = arith.constant 0 : index
    %54 = vector.load %arg11[%c104, %c0_35] : memref<112x64xf32, #tpu.memory_space<vmem>>, vector<8x64xf32>
    %55 = vector.extract_strided_slice %54 {offsets = [0, 0], sizes = [8, 32], strides = [1, 1]} : vector<8x64xf32> to vector<8x32xf32>
    %56 = vector.extract_strided_slice %54 {offsets = [0, 32], sizes = [8, 32], strides = [1, 1]} : vector<8x64xf32> to vector<8x32xf32>
    %57 = arith.maximumf %55, %56 : vector<8x32xf32>
    %c56_36 = arith.constant 56 : index
    %c0_37 = arith.constant 0 : index
    %58 = vector.load %arg12[%c56_36, %c0_37] : memref<64x32xf32, #tpu.memory_space<vmem>>, vector<8x32xf32>
    tpu.vector_store %arg12[%c56_36, %c0_37], %57 {strides = array<i32>} : memref<64x32xf32, #tpu.memory_space<vmem>>, vector<8x32xf32>,
    %c0_38 = arith.constant 0 : index
    %c0_39 = arith.constant 0 : index
    %59 = vector.load %arg12[%c0_38, %c0_39] : memref<64x32xf32, #tpu.memory_space<vmem>>, vector<64x32xf32>
    %c0_40 = arith.constant 0 : index
    %c0_41 = arith.constant 0 : index
    %60 = vector.load %arg3[%c0_40, %c0_41] : memref<32x256xf32, #tpu.memory_space<vmem>>, vector<32x256xf32>
    %cst_42 = arith.constant dense<0.000000e+00> : vector<64x256xf32>
    %61 = tpu.matmul %59, %60, %cst_42 {dimension_numbers = #tpu.dot_dimension_numbers<[1], [0], [0], [1], [0, 0, 1, 1], [], []>} : vector<64x32xf32>, vector<32x256xf32>, vector<64x256xf32> -> vector<64x256xf32>
    %c0_43 = arith.constant 0 : index
    %c0_44 = arith.constant 0 : index
    %62 = vector.load %arg5[%c0_43, %c0_44] : memref<1x256xf32, #tpu.memory_space<vmem>>, vector<1x256xf32>
    %63 = vector.broadcast %62 : vector<1x256xf32> to vector<64x256xf32>
    %64 = arith.addf %61, %63 : vector<64x256xf32>
    %c0_45 = arith.constant 0 : index
    %c0_46 = arith.constant 0 : index
    %65 = vector.load %arg13[%c0_45, %c0_46] : memref<64x256xf32, #tpu.memory_space<vmem>>, vector<64x256xf32>
    tpu.vector_store %arg13[%c0_45, %c0_46], %64 {strides = array<i32>} : memref<64x256xf32, #tpu.memory_space<vmem>>, vector<64x256xf32>,
    %c0_47 = arith.constant 0 : index
    %c0_48 = arith.constant 0 : index
    %66 = vector.load %arg4[%c0_47, %c0_48] : memref<64x256xf32, #tpu.memory_space<vmem>>, vector<64x256xf32>
    %c0_49 = arith.constant 0 : index
    %c0_50 = arith.constant 0 : index
    %67 = vector.load %arg7[%c0_49, %c0_50] : memref<1x256xf32, #tpu.memory_space<vmem>>, vector<1x256xf32>
    %cst_51 = arith.constant 0.000000e+00 : f32
    %68 = vector.broadcast %cst_51 : f32 to vector<1x256xf32>
    %69 = arith.cmpf one, %67, %68 : vector<1x256xf32>
    %c0_52 = arith.constant 0 : index
    %c0_53 = arith.constant 0 : index
    %70 = vector.load %arg6[%c0_52, %c0_53] : memref<1x64xf32, #tpu.memory_space<vmem>>, vector<1x64xf32>
    %71 = vector.shape_cast %70 : vector<1x64xf32> to vector<1x64xf32>
    %72 = vector.broadcast %71 : vector<1x64xf32> to vector<8x64xf32>
    %73 = math.tanh %72 : vector<8x64xf32>
    %c0_i32 = arith.constant 0 : i32
    %c8_i32 = arith.constant 8 : i32
    %74 = arith.muli %c0_i32, %c8_i32 : i32
    %75 = tpu.assume_multiple %74, 8 : i32
    %c7_i32 = arith.constant 7 : i32
    %76 = arith.subi %c7_i32, %c0_i32 : i32
    %c8_i32_54 = arith.constant 8 : i32
    %77 = arith.muli %76, %c8_i32_54 : i32
    %78 = tpu.assume_multiple %77, 8 : i32
    %79 = arith.index_cast %75 : i32 to index
    %c0_55 = arith.constant 0 : index
    %80 = vector.load %arg13[%79, %c0_55] : memref<64x256xf32, #tpu.memory_space<vmem>>, vector<8x256xf32>
    %81 = arith.index_cast %78 : i32 to index
    %c0_56 = arith.constant 0 : index
    %82 = vector.load %arg13[%81, %c0_56] : memref<64x256xf32, #tpu.memory_space<vmem>>, vector<8x256xf32>
    %83 = vector.shape_cast %69 : vector<1x256xi1> to vector<1x256xi1>
    %84 = vector.broadcast %83 : vector<1x256xi1> to vector<8x256xi1>
    %85 = arith.select %84, %80, %82 : vector<8x256xi1>, vector<8x256xf32>
    %cst_57 = arith.constant dense<0.000000e+00> : vector<8x256xf32>
    %86 = tpu.matmul %73, %66, %cst_57 {dimension_numbers = #tpu.dot_dimension_numbers<[1], [0], [0], [1], [0, 0, 1, 1], [], []>} : vector<8x64xf32>, vector<64x256xf32>, vector<8x256xf32> -> vector<8x256xf32>
    %87 = arith.addf %85, %86 : vector<8x256xf32>
    %88 = vector.extract_strided_slice %87 {offsets = [0, 0], sizes = [8, 192], strides = [1, 1]} : vector<8x256xf32> to vector<8x192xf32>
    %89 = arith.negf %88 : vector<8x192xf32>
    %90 = math.exp %89 : vector<8x192xf32>
    %cst_58 = arith.constant 1.000000e+00 : f32
    %91 = vector.broadcast %cst_58 : f32 to vector<8x192xf32>
    %92 = arith.addf %91, %90 : vector<8x192xf32>
    %93 = arith.divf %91, %92 : vector<8x192xf32>
    %94 = vector.extract_strided_slice %87 {offsets = [0, 192], sizes = [8, 64], strides = [1, 1]} : vector<8x256xf32> to vector<8x64xf32>
    %95 = math.tanh %94 : vector<8x64xf32>
    %96 = vector.extract_strided_slice %93 {offsets = [0, 0], sizes = [8, 64], strides = [1, 1]} : vector<8x192xf32> to vector<8x64xf32>
    %97 = arith.mulf %96, %95 : vector<8x64xf32>
    %98 = vector.extract_strided_slice %93 {offsets = [0, 64], sizes = [8, 64], strides = [1, 1]} : vector<8x192xf32> to vector<8x64xf32>
    %99 = arith.mulf %98, %72 : vector<8x64xf32>
    %100 = arith.addf %97, %99 : vector<8x64xf32>
    %101 = vector.extract_strided_slice %93 {offsets = [0, 128], sizes = [8, 64], strides = [1, 1]} : vector<8x192xf32> to vector<8x64xf32>
    %102 = math.tanh %100 : vector<8x64xf32>
    %103 = arith.mulf %101, %102 : vector<8x64xf32>
    %104 = vector.extract_strided_slice %103 {offsets = [0, 0], sizes = [8, 32], strides = [1, 1]} : vector<8x64xf32> to vector<8x32xf32>
    %105 = arith.index_cast %75 : i32 to index
    %c0_59 = arith.constant 0 : index
    %106 = vector.load %arg14[%105, %c0_59] : memref<64x64xf32, #tpu.memory_space<vmem>>, vector<8x32xf32>
    tpu.vector_store %arg14[%105, %c0_59], %104 {strides = array<i32>} : memref<64x64xf32, #tpu.memory_space<vmem>>, vector<8x32xf32>,
    %107 = vector.extract_strided_slice %103 {offsets = [0, 32], sizes = [8, 32], strides = [1, 1]} : vector<8x64xf32> to vector<8x32xf32>
    %108 = arith.index_cast %78 : i32 to index
    %c32_60 = arith.constant 32 : index
    %109 = vector.load %arg14[%108, %c32_60] : memref<64x64xf32, #tpu.memory_space<vmem>>, vector<8x32xf32>
    tpu.vector_store %arg14[%108, %c32_60], %107 {strides = array<i32>} : memref<64x64xf32, #tpu.memory_space<vmem>>, vector<8x32xf32>,
    %c1_i32 = arith.constant 1 : i32
    %c8_i32_61 = arith.constant 8 : i32
    %110 = arith.muli %c1_i32, %c8_i32_61 : i32
    %111 = tpu.assume_multiple %110, 8 : i32
    %c7_i32_62 = arith.constant 7 : i32
    %112 = arith.subi %c7_i32_62, %c1_i32 : i32
    %c8_i32_63 = arith.constant 8 : i32
    %113 = arith.muli %112, %c8_i32_63 : i32
    %114 = tpu.assume_multiple %113, 8 : i32
    %115 = arith.index_cast %111 : i32 to index
    %c0_64 = arith.constant 0 : index
    %116 = vector.load %arg13[%115, %c0_64] : memref<64x256xf32, #tpu.memory_space<vmem>>, vector<8x256xf32>
    %117 = arith.index_cast %114 : i32 to index
    %c0_65 = arith.constant 0 : index
    %118 = vector.load %arg13[%117, %c0_65] : memref<64x256xf32, #tpu.memory_space<vmem>>, vector<8x256xf32>
    %119 = vector.shape_cast %69 : vector<1x256xi1> to vector<1x256xi1>
    %120 = vector.broadcast %119 : vector<1x256xi1> to vector<8x256xi1>
    %121 = arith.select %120, %116, %118 : vector<8x256xi1>, vector<8x256xf32>
    %cst_66 = arith.constant dense<0.000000e+00> : vector<8x256xf32>
    %122 = tpu.matmul %103, %66, %cst_66 {dimension_numbers = #tpu.dot_dimension_numbers<[1], [0], [0], [1], [0, 0, 1, 1], [], []>} : vector<8x64xf32>, vector<64x256xf32>, vector<8x256xf32> -> vector<8x256xf32>
    %123 = arith.addf %121, %122 : vector<8x256xf32>
    %124 = vector.extract_strided_slice %123 {offsets = [0, 0], sizes = [8, 192], strides = [1, 1]} : vector<8x256xf32> to vector<8x192xf32>
    %125 = arith.negf %124 : vector<8x192xf32>
    %126 = math.exp %125 : vector<8x192xf32>
    %cst_67 = arith.constant 1.000000e+00 : f32
    %127 = vector.broadcast %cst_67 : f32 to vector<8x192xf32>
    %128 = arith.addf %127, %126 : vector<8x192xf32>
    %129 = arith.divf %127, %128 : vector<8x192xf32>
    %130 = vector.extract_strided_slice %123 {offsets = [0, 192], sizes = [8, 64], strides = [1, 1]} : vector<8x256xf32> to vector<8x64xf32>
    %131 = math.tanh %130 : vector<8x64xf32>
    %132 = vector.extract_strided_slice %129 {offsets = [0, 0], sizes = [8, 64], strides = [1, 1]} : vector<8x192xf32> to vector<8x64xf32>
    %133 = arith.mulf %132, %131 : vector<8x64xf32>
    %134 = vector.extract_strided_slice %129 {offsets = [0, 64], sizes = [8, 64], strides = [1, 1]} : vector<8x192xf32> to vector<8x64xf32>
    %135 = arith.mulf %134, %100 : vector<8x64xf32>
    %136 = arith.addf %133, %135 : vector<8x64xf32>
    %137 = vector.extract_strided_slice %129 {offsets = [0, 128], sizes = [8, 64], strides = [1, 1]} : vector<8x192xf32> to vector<8x64xf32>
    %138 = math.tanh %136 : vector<8x64xf32>
    %139 = arith.mulf %137, %138 : vector<8x64xf32>
    %140 = vector.extract_strided_slice %139 {offsets = [0, 0], sizes = [8, 32], strides = [1, 1]} : vector<8x64xf32> to vector<8x32xf32>
    %141 = arith.index_cast %111 : i32 to index
    %c0_68 = arith.constant 0 : index
    %142 = vector.load %arg14[%141, %c0_68] : memref<64x64xf32, #tpu.memory_space<vmem>>, vector<8x32xf32>
    tpu.vector_store %arg14[%141, %c0_68], %140 {strides = array<i32>} : memref<64x64xf32, #tpu.memory_space<vmem>>, vector<8x32xf32>,
    %143 = vector.extract_strided_slice %139 {offsets = [0, 32], sizes = [8, 32], strides = [1, 1]} : vector<8x64xf32> to vector<8x32xf32>
    %144 = arith.index_cast %114 : i32 to index
    %c32_69 = arith.constant 32 : index
    %145 = vector.load %arg14[%144, %c32_69] : memref<64x64xf32, #tpu.memory_space<vmem>>, vector<8x32xf32>
    tpu.vector_store %arg14[%144, %c32_69], %143 {strides = array<i32>} : memref<64x64xf32, #tpu.memory_space<vmem>>, vector<8x32xf32>,
    %c2_i32 = arith.constant 2 : i32
    %c8_i32_70 = arith.constant 8 : i32
    %146 = arith.muli %c2_i32, %c8_i32_70 : i32
    %147 = tpu.assume_multiple %146, 8 : i32
    %c7_i32_71 = arith.constant 7 : i32
    %148 = arith.subi %c7_i32_71, %c2_i32 : i32
    %c8_i32_72 = arith.constant 8 : i32
    %149 = arith.muli %148, %c8_i32_72 : i32
    %150 = tpu.assume_multiple %149, 8 : i32
    %151 = arith.index_cast %147 : i32 to index
    %c0_73 = arith.constant 0 : index
    %152 = vector.load %arg13[%151, %c0_73] : memref<64x256xf32, #tpu.memory_space<vmem>>, vector<8x256xf32>
    %153 = arith.index_cast %150 : i32 to index
    %c0_74 = arith.constant 0 : index
    %154 = vector.load %arg13[%153, %c0_74] : memref<64x256xf32, #tpu.memory_space<vmem>>, vector<8x256xf32>
    %155 = vector.shape_cast %69 : vector<1x256xi1> to vector<1x256xi1>
    %156 = vector.broadcast %155 : vector<1x256xi1> to vector<8x256xi1>
    %157 = arith.select %156, %152, %154 : vector<8x256xi1>, vector<8x256xf32>
    %cst_75 = arith.constant dense<0.000000e+00> : vector<8x256xf32>
    %158 = tpu.matmul %139, %66, %cst_75 {dimension_numbers = #tpu.dot_dimension_numbers<[1], [0], [0], [1], [0, 0, 1, 1], [], []>} : vector<8x64xf32>, vector<64x256xf32>, vector<8x256xf32> -> vector<8x256xf32>
    %159 = arith.addf %157, %158 : vector<8x256xf32>
    %160 = vector.extract_strided_slice %159 {offsets = [0, 0], sizes = [8, 192], strides = [1, 1]} : vector<8x256xf32> to vector<8x192xf32>
    %161 = arith.negf %160 : vector<8x192xf32>
    %162 = math.exp %161 : vector<8x192xf32>
    %cst_76 = arith.constant 1.000000e+00 : f32
    %163 = vector.broadcast %cst_76 : f32 to vector<8x192xf32>
    %164 = arith.addf %163, %162 : vector<8x192xf32>
    %165 = arith.divf %163, %164 : vector<8x192xf32>
    %166 = vector.extract_strided_slice %159 {offsets = [0, 192], sizes = [8, 64], strides = [1, 1]} : vector<8x256xf32> to vector<8x64xf32>
    %167 = math.tanh %166 : vector<8x64xf32>
    %168 = vector.extract_strided_slice %165 {offsets = [0, 0], sizes = [8, 64], strides = [1, 1]} : vector<8x192xf32> to vector<8x64xf32>
    %169 = arith.mulf %168, %167 : vector<8x64xf32>
    %170 = vector.extract_strided_slice %165 {offsets = [0, 64], sizes = [8, 64], strides = [1, 1]} : vector<8x192xf32> to vector<8x64xf32>
    %171 = arith.mulf %170, %136 : vector<8x64xf32>
    %172 = arith.addf %169, %171 : vector<8x64xf32>
    %173 = vector.extract_strided_slice %165 {offsets = [0, 128], sizes = [8, 64], strides = [1, 1]} : vector<8x192xf32> to vector<8x64xf32>
    %174 = math.tanh %172 : vector<8x64xf32>
    %175 = arith.mulf %173, %174 : vector<8x64xf32>
    %176 = vector.extract_strided_slice %175 {offsets = [0, 0], sizes = [8, 32], strides = [1, 1]} : vector<8x64xf32> to vector<8x32xf32>
    %177 = arith.index_cast %147 : i32 to index
    %c0_77 = arith.constant 0 : index
    %178 = vector.load %arg14[%177, %c0_77] : memref<64x64xf32, #tpu.memory_space<vmem>>, vector<8x32xf32>
    tpu.vector_store %arg14[%177, %c0_77], %176 {strides = array<i32>} : memref<64x64xf32, #tpu.memory_space<vmem>>, vector<8x32xf32>,
    %179 = vector.extract_strided_slice %175 {offsets = [0, 32], sizes = [8, 32], strides = [1, 1]} : vector<8x64xf32> to vector<8x32xf32>
    %180 = arith.index_cast %150 : i32 to index
    %c32_78 = arith.constant 32 : index
    %181 = vector.load %arg14[%180, %c32_78] : memref<64x64xf32, #tpu.memory_space<vmem>>, vector<8x32xf32>
    tpu.vector_store %arg14[%180, %c32_78], %179 {strides = array<i32>} : memref<64x64xf32, #tpu.memory_space<vmem>>, vector<8x32xf32>,
    %c3_i32 = arith.constant 3 : i32
    %c8_i32_79 = arith.constant 8 : i32
    %182 = arith.muli %c3_i32, %c8_i32_79 : i32
    %183 = tpu.assume_multiple %182, 8 : i32
    %c7_i32_80 = arith.constant 7 : i32
    %184 = arith.subi %c7_i32_80, %c3_i32 : i32
    %c8_i32_81 = arith.constant 8 : i32
    %185 = arith.muli %184, %c8_i32_81 : i32
    %186 = tpu.assume_multiple %185, 8 : i32
    %187 = arith.index_cast %183 : i32 to index
    %c0_82 = arith.constant 0 : index
    %188 = vector.load %arg13[%187, %c0_82] : memref<64x256xf32, #tpu.memory_space<vmem>>, vector<8x256xf32>
    %189 = arith.index_cast %186 : i32 to index
    %c0_83 = arith.constant 0 : index
    %190 = vector.load %arg13[%189, %c0_83] : memref<64x256xf32, #tpu.memory_space<vmem>>, vector<8x256xf32>
    %191 = vector.shape_cast %69 : vector<1x256xi1> to vector<1x256xi1>
    %192 = vector.broadcast %191 : vector<1x256xi1> to vector<8x256xi1>
    %193 = arith.select %192, %188, %190 : vector<8x256xi1>, vector<8x256xf32>
    %cst_84 = arith.constant dense<0.000000e+00> : vector<8x256xf32>
    %194 = tpu.matmul %175, %66, %cst_84 {dimension_numbers = #tpu.dot_dimension_numbers<[1], [0], [0], [1], [0, 0, 1, 1], [], []>} : vector<8x64xf32>, vector<64x256xf32>, vector<8x256xf32> -> vector<8x256xf32>
    %195 = arith.addf %193, %194 : vector<8x256xf32>
    %196 = vector.extract_strided_slice %195 {offsets = [0, 0], sizes = [8, 192], strides = [1, 1]} : vector<8x256xf32> to vector<8x192xf32>
    %197 = arith.negf %196 : vector<8x192xf32>
    %198 = math.exp %197 : vector<8x192xf32>
    %cst_85 = arith.constant 1.000000e+00 : f32
    %199 = vector.broadcast %cst_85 : f32 to vector<8x192xf32>
    %200 = arith.addf %199, %198 : vector<8x192xf32>
    %201 = arith.divf %199, %200 : vector<8x192xf32>
    %202 = vector.extract_strided_slice %195 {offsets = [0, 192], sizes = [8, 64], strides = [1, 1]} : vector<8x256xf32> to vector<8x64xf32>
    %203 = math.tanh %202 : vector<8x64xf32>
    %204 = vector.extract_strided_slice %201 {offsets = [0, 0], sizes = [8, 64], strides = [1, 1]} : vector<8x192xf32> to vector<8x64xf32>
    %205 = arith.mulf %204, %203 : vector<8x64xf32>
    %206 = vector.extract_strided_slice %201 {offsets = [0, 64], sizes = [8, 64], strides = [1, 1]} : vector<8x192xf32> to vector<8x64xf32>
    %207 = arith.mulf %206, %172 : vector<8x64xf32>
    %208 = arith.addf %205, %207 : vector<8x64xf32>
    %209 = vector.extract_strided_slice %201 {offsets = [0, 128], sizes = [8, 64], strides = [1, 1]} : vector<8x192xf32> to vector<8x64xf32>
    %210 = math.tanh %208 : vector<8x64xf32>
    %211 = arith.mulf %209, %210 : vector<8x64xf32>
    %212 = vector.extract_strided_slice %211 {offsets = [0, 0], sizes = [8, 32], strides = [1, 1]} : vector<8x64xf32> to vector<8x32xf32>
    %213 = arith.index_cast %183 : i32 to index
    %c0_86 = arith.constant 0 : index
    %214 = vector.load %arg14[%213, %c0_86] : memref<64x64xf32, #tpu.memory_space<vmem>>, vector<8x32xf32>
    tpu.vector_store %arg14[%213, %c0_86], %212 {strides = array<i32>} : memref<64x64xf32, #tpu.memory_space<vmem>>, vector<8x32xf32>,
    %215 = vector.extract_strided_slice %211 {offsets = [0, 32], sizes = [8, 32], strides = [1, 1]} : vector<8x64xf32> to vector<8x32xf32>
    %216 = arith.index_cast %186 : i32 to index
    %c32_87 = arith.constant 32 : index
    %217 = vector.load %arg14[%216, %c32_87] : memref<64x64xf32, #tpu.memory_space<vmem>>, vector<8x32xf32>
    tpu.vector_store %arg14[%216, %c32_87], %215 {strides = array<i32>} : memref<64x64xf32, #tpu.memory_space<vmem>>, vector<8x32xf32>,
    %c4_i32 = arith.constant 4 : i32
    %c8_i32_88 = arith.constant 8 : i32
    %218 = arith.muli %c4_i32, %c8_i32_88 : i32
    %219 = tpu.assume_multiple %218, 8 : i32
    %c7_i32_89 = arith.constant 7 : i32
    %220 = arith.subi %c7_i32_89, %c4_i32 : i32
    %c8_i32_90 = arith.constant 8 : i32
    %221 = arith.muli %220, %c8_i32_90 : i32
    %222 = tpu.assume_multiple %221, 8 : i32
    %223 = arith.index_cast %219 : i32 to index
    %c0_91 = arith.constant 0 : index
    %224 = vector.load %arg13[%223, %c0_91] : memref<64x256xf32, #tpu.memory_space<vmem>>, vector<8x256xf32>
    %225 = arith.index_cast %222 : i32 to index
    %c0_92 = arith.constant 0 : index
    %226 = vector.load %arg13[%225, %c0_92] : memref<64x256xf32, #tpu.memory_space<vmem>>, vector<8x256xf32>
    %227 = vector.shape_cast %69 : vector<1x256xi1> to vector<1x256xi1>
    %228 = vector.broadcast %227 : vector<1x256xi1> to vector<8x256xi1>
    %229 = arith.select %228, %224, %226 : vector<8x256xi1>, vector<8x256xf32>
    %cst_93 = arith.constant dense<0.000000e+00> : vector<8x256xf32>
    %230 = tpu.matmul %211, %66, %cst_93 {dimension_numbers = #tpu.dot_dimension_numbers<[1], [0], [0], [1], [0, 0, 1, 1], [], []>} : vector<8x64xf32>, vector<64x256xf32>, vector<8x256xf32> -> vector<8x256xf32>
    %231 = arith.addf %229, %230 : vector<8x256xf32>
    %232 = vector.extract_strided_slice %231 {offsets = [0, 0], sizes = [8, 192], strides = [1, 1]} : vector<8x256xf32> to vector<8x192xf32>
    %233 = arith.negf %232 : vector<8x192xf32>
    %234 = math.exp %233 : vector<8x192xf32>
    %cst_94 = arith.constant 1.000000e+00 : f32
    %235 = vector.broadcast %cst_94 : f32 to vector<8x192xf32>
    %236 = arith.addf %235, %234 : vector<8x192xf32>
    %237 = arith.divf %235, %236 : vector<8x192xf32>
    %238 = vector.extract_strided_slice %231 {offsets = [0, 192], sizes = [8, 64], strides = [1, 1]} : vector<8x256xf32> to vector<8x64xf32>
    %239 = math.tanh %238 : vector<8x64xf32>
    %240 = vector.extract_strided_slice %237 {offsets = [0, 0], sizes = [8, 64], strides = [1, 1]} : vector<8x192xf32> to vector<8x64xf32>
    %241 = arith.mulf %240, %239 : vector<8x64xf32>
    %242 = vector.extract_strided_slice %237 {offsets = [0, 64], sizes = [8, 64], strides = [1, 1]} : vector<8x192xf32> to vector<8x64xf32>
    %243 = arith.mulf %242, %208 : vector<8x64xf32>
    %244 = arith.addf %241, %243 : vector<8x64xf32>
    %245 = vector.extract_strided_slice %237 {offsets = [0, 128], sizes = [8, 64], strides = [1, 1]} : vector<8x192xf32> to vector<8x64xf32>
    %246 = math.tanh %244 : vector<8x64xf32>
    %247 = arith.mulf %245, %246 : vector<8x64xf32>
    %248 = vector.extract_strided_slice %247 {offsets = [0, 0], sizes = [8, 32], strides = [1, 1]} : vector<8x64xf32> to vector<8x32xf32>
    %249 = arith.index_cast %219 : i32 to index
    %c0_95 = arith.constant 0 : index
    %250 = vector.load %arg14[%249, %c0_95] : memref<64x64xf32, #tpu.memory_space<vmem>>, vector<8x32xf32>
    tpu.vector_store %arg14[%249, %c0_95], %248 {strides = array<i32>} : memref<64x64xf32, #tpu.memory_space<vmem>>, vector<8x32xf32>,
    %251 = vector.extract_strided_slice %247 {offsets = [0, 32], sizes = [8, 32], strides = [1, 1]} : vector<8x64xf32> to vector<8x32xf32>
    %252 = arith.index_cast %222 : i32 to index
    %c32_96 = arith.constant 32 : index
    %253 = vector.load %arg14[%252, %c32_96] : memref<64x64xf32, #tpu.memory_space<vmem>>, vector<8x32xf32>
    tpu.vector_store %arg14[%252, %c32_96], %251 {strides = array<i32>} : memref<64x64xf32, #tpu.memory_space<vmem>>, vector<8x32xf32>,
    %c5_i32 = arith.constant 5 : i32
    %c8_i32_97 = arith.constant 8 : i32
    %254 = arith.muli %c5_i32, %c8_i32_97 : i32
    %255 = tpu.assume_multiple %254, 8 : i32
    %c7_i32_98 = arith.constant 7 : i32
    %256 = arith.subi %c7_i32_98, %c5_i32 : i32
    %c8_i32_99 = arith.constant 8 : i32
    %257 = arith.muli %256, %c8_i32_99 : i32
    %258 = tpu.assume_multiple %257, 8 : i32
    %259 = arith.index_cast %255 : i32 to index
    %c0_100 = arith.constant 0 : index
    %260 = vector.load %arg13[%259, %c0_100] : memref<64x256xf32, #tpu.memory_space<vmem>>, vector<8x256xf32>
    %261 = arith.index_cast %258 : i32 to index
    %c0_101 = arith.constant 0 : index
    %262 = vector.load %arg13[%261, %c0_101] : memref<64x256xf32, #tpu.memory_space<vmem>>, vector<8x256xf32>
    %263 = vector.shape_cast %69 : vector<1x256xi1> to vector<1x256xi1>
    %264 = vector.broadcast %263 : vector<1x256xi1> to vector<8x256xi1>
    %265 = arith.select %264, %260, %262 : vector<8x256xi1>, vector<8x256xf32>
    %cst_102 = arith.constant dense<0.000000e+00> : vector<8x256xf32>
    %266 = tpu.matmul %247, %66, %cst_102 {dimension_numbers = #tpu.dot_dimension_numbers<[1], [0], [0], [1], [0, 0, 1, 1], [], []>} : vector<8x64xf32>, vector<64x256xf32>, vector<8x256xf32> -> vector<8x256xf32>
    %267 = arith.addf %265, %266 : vector<8x256xf32>
    %268 = vector.extract_strided_slice %267 {offsets = [0, 0], sizes = [8, 192], strides = [1, 1]} : vector<8x256xf32> to vector<8x192xf32>
    %269 = arith.negf %268 : vector<8x192xf32>
    %270 = math.exp %269 : vector<8x192xf32>
    %cst_103 = arith.constant 1.000000e+00 : f32
    %271 = vector.broadcast %cst_103 : f32 to vector<8x192xf32>
    %272 = arith.addf %271, %270 : vector<8x192xf32>
    %273 = arith.divf %271, %272 : vector<8x192xf32>
    %274 = vector.extract_strided_slice %267 {offsets = [0, 192], sizes = [8, 64], strides = [1, 1]} : vector<8x256xf32> to vector<8x64xf32>
    %275 = math.tanh %274 : vector<8x64xf32>
    %276 = vector.extract_strided_slice %273 {offsets = [0, 0], sizes = [8, 64], strides = [1, 1]} : vector<8x192xf32> to vector<8x64xf32>
    %277 = arith.mulf %276, %275 : vector<8x64xf32>
    %278 = vector.extract_strided_slice %273 {offsets = [0, 64], sizes = [8, 64], strides = [1, 1]} : vector<8x192xf32> to vector<8x64xf32>
    %279 = arith.mulf %278, %244 : vector<8x64xf32>
    %280 = arith.addf %277, %279 : vector<8x64xf32>
    %281 = vector.extract_strided_slice %273 {offsets = [0, 128], sizes = [8, 64], strides = [1, 1]} : vector<8x192xf32> to vector<8x64xf32>
    %282 = math.tanh %280 : vector<8x64xf32>
    %283 = arith.mulf %281, %282 : vector<8x64xf32>
    %284 = vector.extract_strided_slice %283 {offsets = [0, 0], sizes = [8, 32], strides = [1, 1]} : vector<8x64xf32> to vector<8x32xf32>
    %285 = arith.index_cast %255 : i32 to index
    %c0_104 = arith.constant 0 : index
    %286 = vector.load %arg14[%285, %c0_104] : memref<64x64xf32, #tpu.memory_space<vmem>>, vector<8x32xf32>
    tpu.vector_store %arg14[%285, %c0_104], %284 {strides = array<i32>} : memref<64x64xf32, #tpu.memory_space<vmem>>, vector<8x32xf32>,
    %287 = vector.extract_strided_slice %283 {offsets = [0, 32], sizes = [8, 32], strides = [1, 1]} : vector<8x64xf32> to vector<8x32xf32>
    %288 = arith.index_cast %258 : i32 to index
    %c32_105 = arith.constant 32 : index
    %289 = vector.load %arg14[%288, %c32_105] : memref<64x64xf32, #tpu.memory_space<vmem>>, vector<8x32xf32>
    tpu.vector_store %arg14[%288, %c32_105], %287 {strides = array<i32>} : memref<64x64xf32, #tpu.memory_space<vmem>>, vector<8x32xf32>,
    %c6_i32 = arith.constant 6 : i32
    %c8_i32_106 = arith.constant 8 : i32
    %290 = arith.muli %c6_i32, %c8_i32_106 : i32
    %291 = tpu.assume_multiple %290, 8 : i32
    %c7_i32_107 = arith.constant 7 : i32
    %292 = arith.subi %c7_i32_107, %c6_i32 : i32
    %c8_i32_108 = arith.constant 8 : i32
    %293 = arith.muli %292, %c8_i32_108 : i32
    %294 = tpu.assume_multiple %293, 8 : i32
    %295 = arith.index_cast %291 : i32 to index
    %c0_109 = arith.constant 0 : index
    %296 = vector.load %arg13[%295, %c0_109] : memref<64x256xf32, #tpu.memory_space<vmem>>, vector<8x256xf32>
    %297 = arith.index_cast %294 : i32 to index
    %c0_110 = arith.constant 0 : index
    %298 = vector.load %arg13[%297, %c0_110] : memref<64x256xf32, #tpu.memory_space<vmem>>, vector<8x256xf32>
    %299 = vector.shape_cast %69 : vector<1x256xi1> to vector<1x256xi1>
    %300 = vector.broadcast %299 : vector<1x256xi1> to vector<8x256xi1>
    %301 = arith.select %300, %296, %298 : vector<8x256xi1>, vector<8x256xf32>
    %cst_111 = arith.constant dense<0.000000e+00> : vector<8x256xf32>
    %302 = tpu.matmul %283, %66, %cst_111 {dimension_numbers = #tpu.dot_dimension_numbers<[1], [0], [0], [1], [0, 0, 1, 1], [], []>} : vector<8x64xf32>, vector<64x256xf32>, vector<8x256xf32> -> vector<8x256xf32>
    %303 = arith.addf %301, %302 : vector<8x256xf32>
    %304 = vector.extract_strided_slice %303 {offsets = [0, 0], sizes = [8, 192], strides = [1, 1]} : vector<8x256xf32> to vector<8x192xf32>
    %305 = arith.negf %304 : vector<8x192xf32>
    %306 = math.exp %305 : vector<8x192xf32>
    %cst_112 = arith.constant 1.000000e+00 : f32
    %307 = vector.broadcast %cst_112 : f32 to vector<8x192xf32>
    %308 = arith.addf %307, %306 : vector<8x192xf32>
    %309 = arith.divf %307, %308 : vector<8x192xf32>
    %310 = vector.extract_strided_slice %303 {offsets = [0, 192], sizes = [8, 64], strides = [1, 1]} : vector<8x256xf32> to vector<8x64xf32>
    %311 = math.tanh %310 : vector<8x64xf32>
    %312 = vector.extract_strided_slice %309 {offsets = [0, 0], sizes = [8, 64], strides = [1, 1]} : vector<8x192xf32> to vector<8x64xf32>
    %313 = arith.mulf %312, %311 : vector<8x64xf32>
    %314 = vector.extract_strided_slice %309 {offsets = [0, 64], sizes = [8, 64], strides = [1, 1]} : vector<8x192xf32> to vector<8x64xf32>
    %315 = arith.mulf %314, %280 : vector<8x64xf32>
    %316 = arith.addf %313, %315 : vector<8x64xf32>
    %317 = vector.extract_strided_slice %309 {offsets = [0, 128], sizes = [8, 64], strides = [1, 1]} : vector<8x192xf32> to vector<8x64xf32>
    %318 = math.tanh %316 : vector<8x64xf32>
    %319 = arith.mulf %317, %318 : vector<8x64xf32>
    %320 = vector.extract_strided_slice %319 {offsets = [0, 0], sizes = [8, 32], strides = [1, 1]} : vector<8x64xf32> to vector<8x32xf32>
    %321 = arith.index_cast %291 : i32 to index
    %c0_113 = arith.constant 0 : index
    %322 = vector.load %arg14[%321, %c0_113] : memref<64x64xf32, #tpu.memory_space<vmem>>, vector<8x32xf32>
    tpu.vector_store %arg14[%321, %c0_113], %320 {strides = array<i32>} : memref<64x64xf32, #tpu.memory_space<vmem>>, vector<8x32xf32>,
    %323 = vector.extract_strided_slice %319 {offsets = [0, 32], sizes = [8, 32], strides = [1, 1]} : vector<8x64xf32> to vector<8x32xf32>
    %324 = arith.index_cast %294 : i32 to index
    %c32_114 = arith.constant 32 : index
    %325 = vector.load %arg14[%324, %c32_114] : memref<64x64xf32, #tpu.memory_space<vmem>>, vector<8x32xf32>
    tpu.vector_store %arg14[%324, %c32_114], %323 {strides = array<i32>} : memref<64x64xf32, #tpu.memory_space<vmem>>, vector<8x32xf32>,
    %c7_i32_115 = arith.constant 7 : i32
    %c8_i32_116 = arith.constant 8 : i32
    %326 = arith.muli %c7_i32_115, %c8_i32_116 : i32
    %327 = tpu.assume_multiple %326, 8 : i32
    %c7_i32_117 = arith.constant 7 : i32
    %328 = arith.subi %c7_i32_117, %c7_i32_115 : i32
    %c8_i32_118 = arith.constant 8 : i32
    %329 = arith.muli %328, %c8_i32_118 : i32
    %330 = tpu.assume_multiple %329, 8 : i32
    %331 = arith.index_cast %327 : i32 to index
    %c0_119 = arith.constant 0 : index
    %332 = vector.load %arg13[%331, %c0_119] : memref<64x256xf32, #tpu.memory_space<vmem>>, vector<8x256xf32>
    %333 = arith.index_cast %330 : i32 to index
    %c0_120 = arith.constant 0 : index
    %334 = vector.load %arg13[%333, %c0_120] : memref<64x256xf32, #tpu.memory_space<vmem>>, vector<8x256xf32>
    %335 = vector.shape_cast %69 : vector<1x256xi1> to vector<1x256xi1>
    %336 = vector.broadcast %335 : vector<1x256xi1> to vector<8x256xi1>
    %337 = arith.select %336, %332, %334 : vector<8x256xi1>, vector<8x256xf32>
    %cst_121 = arith.constant dense<0.000000e+00> : vector<8x256xf32>
    %338 = tpu.matmul %319, %66, %cst_121 {dimension_numbers = #tpu.dot_dimension_numbers<[1], [0], [0], [1], [0, 0, 1, 1], [], []>} : vector<8x64xf32>, vector<64x256xf32>, vector<8x256xf32> -> vector<8x256xf32>
    %339 = arith.addf %337, %338 : vector<8x256xf32>
    %340 = vector.extract_strided_slice %339 {offsets = [0, 0], sizes = [8, 192], strides = [1, 1]} : vector<8x256xf32> to vector<8x192xf32>
    %341 = arith.negf %340 : vector<8x192xf32>
    %342 = math.exp %341 : vector<8x192xf32>
    %cst_122 = arith.constant 1.000000e+00 : f32
    %343 = vector.broadcast %cst_122 : f32 to vector<8x192xf32>
    %344 = arith.addf %343, %342 : vector<8x192xf32>
    %345 = arith.divf %343, %344 : vector<8x192xf32>
    %346 = vector.extract_strided_slice %339 {offsets = [0, 192], sizes = [8, 64], strides = [1, 1]} : vector<8x256xf32> to vector<8x64xf32>
    %347 = math.tanh %346 : vector<8x64xf32>
    %348 = vector.extract_strided_slice %345 {offsets = [0, 0], sizes = [8, 64], strides = [1, 1]} : vector<8x192xf32> to vector<8x64xf32>
    %349 = arith.mulf %348, %347 : vector<8x64xf32>
    %350 = vector.extract_strided_slice %345 {offsets = [0, 64], sizes = [8, 64], strides = [1, 1]} : vector<8x192xf32> to vector<8x64xf32>
    %351 = arith.mulf %350, %316 : vector<8x64xf32>
    %352 = arith.addf %349, %351 : vector<8x64xf32>
    %353 = vector.extract_strided_slice %345 {offsets = [0, 128], sizes = [8, 64], strides = [1, 1]} : vector<8x192xf32> to vector<8x64xf32>
    %354 = math.tanh %352 : vector<8x64xf32>
    %355 = arith.mulf %353, %354 : vector<8x64xf32>
    %356 = vector.extract_strided_slice %355 {offsets = [0, 0], sizes = [8, 32], strides = [1, 1]} : vector<8x64xf32> to vector<8x32xf32>
    %357 = arith.index_cast %327 : i32 to index
    %c0_123 = arith.constant 0 : index
    %358 = vector.load %arg14[%357, %c0_123] : memref<64x64xf32, #tpu.memory_space<vmem>>, vector<8x32xf32>
    tpu.vector_store %arg14[%357, %c0_123], %356 {strides = array<i32>} : memref<64x64xf32, #tpu.memory_space<vmem>>, vector<8x32xf32>,
    %359 = vector.extract_strided_slice %355 {offsets = [0, 32], sizes = [8, 32], strides = [1, 1]} : vector<8x64xf32> to vector<8x32xf32>
    %360 = arith.index_cast %330 : i32 to index
    %c32_124 = arith.constant 32 : index
    %361 = vector.load %arg14[%360, %c32_124] : memref<64x64xf32, #tpu.memory_space<vmem>>, vector<8x32xf32>
    tpu.vector_store %arg14[%360, %c32_124], %359 {strides = array<i32>} : memref<64x64xf32, #tpu.memory_space<vmem>>, vector<8x32xf32>,
    %c8_i32_125 = arith.constant 8 : i32
    %c0_126 = arith.constant 0 : index
    %c0_127 = arith.constant 0 : index
    %362 = vector.load %arg14[%c0_126, %c0_127] : memref<64x64xf32, #tpu.memory_space<vmem>>, vector<64x64xf32>
    %c0_128 = arith.constant 0 : index
    %c0_129 = arith.constant 0 : index
    %363 = vector.load %arg8[%c0_128, %c0_129] : memref<64x64xf32, #tpu.memory_space<vmem>>, vector<64x64xf32>
    %364 = arith.mulf %362, %363 : vector<64x64xf32>
    %cst_130 = arith.constant dense<0.000000e+00> : vector<64xf32>
    %365 = vector.multi_reduction <add>, %364, %cst_130 [0] : vector<64x64xf32> to vector<64xf32>
    %366 = vector.shape_cast %365 : vector<64xf32> to vector<1x64xf32>
    %cst_131 = arith.constant 6.250000e-02 : f32
    %367 = vector.broadcast %cst_131 : f32 to vector<1x64xf32>
    %368 = arith.mulf %366, %367 : vector<1x64xf32>
    %369 = vector.broadcast %368 : vector<1x64xf32> to vector<64x64xf32>
    %370 = arith.subf %362, %369 : vector<64x64xf32>
    %371 = arith.mulf %370, %363 : vector<64x64xf32>
    %372 = arith.mulf %371, %371 : vector<64x64xf32>
    %cst_132 = arith.constant dense<0.000000e+00> : vector<64xf32>
    %373 = vector.multi_reduction <add>, %372, %cst_132 [0] : vector<64x64xf32> to vector<64xf32>
    %374 = vector.shape_cast %373 : vector<64xf32> to vector<1x64xf32>
    %cst_133 = arith.constant 6.250000e-02 : f32
    %375 = vector.broadcast %cst_133 : f32 to vector<1x64xf32>
    %376 = arith.mulf %374, %375 : vector<1x64xf32>
    %377 = vector.broadcast %368 : vector<1x64xf32> to vector<64x64xf32>
    %378 = arith.subf %362, %377 : vector<64x64xf32>
    %cst_134 = arith.constant 9.99999974E-6 : f32
    %379 = vector.broadcast %cst_134 : f32 to vector<1x64xf32>
    %380 = arith.addf %376, %379 : vector<1x64xf32>
    %381 = math.rsqrt %380 : vector<1x64xf32>
    %382 = vector.broadcast %381 : vector<1x64xf32> to vector<64x64xf32>
    %383 = arith.mulf %378, %382 : vector<64x64xf32>
    %384 = arith.truncf %383 : vector<64x64xf32> to vector<64x64xbf16>
    %c0_135 = arith.constant 0 : index
    %c0_136 = arith.constant 0 : index
    %385 = vector.load %arg9[%c0_135, %c0_136] : memref<64x128xbf16, #tpu.memory_space<vmem>>, vector<64x128xbf16>
    %cst_137 = arith.constant dense<0.000000e+00> : vector<64x128xf32>
    %386 = tpu.matmul %384, %385, %cst_137 {dimension_numbers = #tpu.dot_dimension_numbers<[1], [0], [0], [1], [0, 0, 1, 1], [], []>} : vector<64x64xbf16>, vector<64x128xbf16>, vector<64x128xf32> -> vector<64x128xf32>
    %c0_138 = arith.constant 0 : index
    %c0_139 = arith.constant 0 : index
    %387 = vector.load %arg10[%c0_138, %c0_139] : memref<64x128xf32, #tpu.memory_space<vmem>>, vector<64x128xf32>
    tpu.vector_store %arg10[%c0_138, %c0_139], %386 {strides = array<i32>} : memref<64x128xf32, #tpu.memory_space<vmem>>, vector<64x128xf32>,
    return
  }
}

</mosaic_0001>

<llo_original>
// kernel: sparnet_lstm_forward.1
$region0: #{sparnet_lstm_forward.1}
  #allocation0 [shape = 'u32[]', space=smem, size = 0x4, offset = 0x4, fixed_abs, tag = 'smem constant byte address 0x4 - core index']
  #allocation1 [shape = 'u32[144,128]{1,0:T(1,128)}', space=vmem, size = 0x12000, scoped, tag = 'internal scratch']
  #allocation2 [shape = 'f32[112,64]{1,0:T(8,128)}', space=vmem, size = 0xe000, scoped, tag = 'scratch operand']
  #allocation3 [shape = 'f32[64,32]{1,0:T(8,128)}', space=vmem, size = 0x8000, scoped, tag = 'scratch operand']
  #allocation4 [shape = 'f32[64,256]{1,0:T(8,128)}', space=vmem, size = 0x10000, scoped, tag = 'scratch operand']
  #allocation5 [shape = 'f32[64,64]{1,0:T(8,128)}', space=vmem, size = 0x8000, scoped, tag = 'scratch operand']
  %s0 = inlined_call_operand.vmem [shape: f32[112,170], index: 0, kind: input, shape index: {}]
  %s1 = inlined_call_operand.vmem [shape: f32[170,64], index: 1, kind: input, shape index: {}]
  %s2 = inlined_call_operand.vmem [shape: f32[1,64], index: 2, kind: input, shape index: {}]
  %s3 = inlined_call_operand.vmem [shape: f32[32,256], index: 3, kind: input, shape index: {}]
  %s4 = inlined_call_operand.vmem [shape: f32[64,256], index: 4, kind: input, shape index: {}]
  %s5 = inlined_call_operand.vmem [shape: f32[1,256], index: 5, kind: input, shape index: {}]
  %s6 = inlined_call_operand.vmem [shape: f32[1,64], index: 6, kind: input, shape index: {}]
  %s7 = inlined_call_operand.vmem [shape: f32[1,256], index: 7, kind: input, shape index: {}]
  %s8 = inlined_call_operand.vmem [shape: f32[64,64], index: 8, kind: input, shape index: {}]
  %s9 = inlined_call_operand.vmem [shape: bf16[64,128], index: 9, kind: input, shape index: {}]
  %s10 = inlined_call_operand.vmem [shape: f32[64,128], index: 10, kind: output, shape index: {}]
  %s11 = sld [smem:[#allocation0]]
  $region50: #{sparnet_lstm_forward.1} parent=0
    _
  %s13 = ssub.s32 1, %s11
  %s14 = scalar_select 0, %s13, %s11
  // Predicated region
  $region2: #{sparnet_lstm_forward.1} parent=0 // pred_check
    _
  $region3: #{sparnet_lstm_forward.1} parent=0 // pred_check_branch
    %16 = sbr.rel (0) target = $region5
  $region4: #{sparnet_lstm_forward.1} parent=0 // pred_region
    _
  $region5: #{sparnet_lstm_forward.1} parent=0 // pred_fallthru
    _
  // Predicated region
  $region6: #{sparnet_lstm_forward.1} parent=0 // pred_check
    _
  $region7: #{sparnet_lstm_forward.1} parent=0 // pred_check_branch
    %18 = sbr.rel (0) target = $region9
  $region8: #{sparnet_lstm_forward.1} parent=0 // pred_region
    _
  $region9: #{sparnet_lstm_forward.1} parent=0 // pred_fallthru
    _
  // Predicated region
  $region10: #{sparnet_lstm_forward.1} parent=0 // pred_check
    _
  $region11: #{sparnet_lstm_forward.1} parent=0 // pred_check_branch
    %20 = sbr.rel (0) target = $region13
  $region12: #{sparnet_lstm_forward.1} parent=0 // pred_region
    _
  $region13: #{sparnet_lstm_forward.1} parent=0 // pred_fallthru
    _
  // Predicated region
  $region14: #{sparnet_lstm_forward.1} parent=0 // pred_check
    _
  $region15: #{sparnet_lstm_forward.1} parent=0 // pred_check_branch
    %22 = sbr.rel (0) target = $region17
  $region16: #{sparnet_lstm_forward.1} parent=0 // pred_region
    _
  $region17: #{sparnet_lstm_forward.1} parent=0 // pred_fallthru
    _
  // Predicated region
  $region18: #{sparnet_lstm_forward.1} parent=0 // pred_check
    _
  $region19: #{sparnet_lstm_forward.1} parent=0 // pred_check_branch
    %24 = sbr.rel (0) target = $region21
  $region20: #{sparnet_lstm_forward.1} parent=0 // pred_region
    _
  $region21: #{sparnet_lstm_forward.1} parent=0 // pred_fallthru
    _
  // Predicated region
  $region22: #{sparnet_lstm_forward.1} parent=0 // pred_check
    _
  $region23: #{sparnet_lstm_forward.1} parent=0 // pred_check_branch
    %26 = sbr.rel (0) target = $region25
  $region24: #{sparnet_lstm_forward.1} parent=0 // pred_region
    _
  $region25: #{sparnet_lstm_forward.1} parent=0 // pred_fallthru
    _
  // Predicated region
  $region26: #{sparnet_lstm_forward.1} parent=0 // pred_check
    _
  $region27: #{sparnet_lstm_forward.1} parent=0 // pred_check_branch
    %28 = sbr.rel (0) target = $region29
  $region28: #{sparnet_lstm_forward.1} parent=0 // pred_region
    _
  $region29: #{sparnet_lstm_forward.1} parent=0 // pred_fallthru
    _
  // Predicated region
  $region30: #{sparnet_lstm_forward.1} parent=0 // pred_check
    _
  $region31: #{sparnet_lstm_forward.1} parent=0 // pred_check_branch
    %30 = sbr.rel (0) target = $region33
  $region32: #{sparnet_lstm_forward.1} parent=0 // pred_region
    _
  $region33: #{sparnet_lstm_forward.1} parent=0 // pred_fallthru
    _
  // Predicated region
  $region34: #{sparnet_lstm_forward.1} parent=0 // pred_check
    _
  $region35: #{sparnet_lstm_forward.1} parent=0 // pred_check_branch
    %32 = sbr.rel (0) target = $region37
  $region36: #{sparnet_lstm_forward.1} parent=0 // pred_region
    _
  $region37: #{sparnet_lstm_forward.1} parent=0 // pred_fallthru
    _
  // Predicated region
  $region38: #{sparnet_lstm_forward.1} parent=0 // pred_check
    _
  $region39: #{sparnet_lstm_forward.1} parent=0 // pred_check_branch
    %34 = sbr.rel (0) target = $region41
  $region40: #{sparnet_lstm_forward.1} parent=0 // pred_region
    _
  $region41: #{sparnet_lstm_forward.1} parent=0 // pred_fallthru
    _
  %v36 = vld [vmem:[%s0] sm:$0xff]
  %v37 = vld [vmem:[%s0 + $0x8] sm:$0xff]
  %v38 = vld [vmem:[%s0 + $0x10] sm:$0xff]
  %v39 = vld [vmem:[%s0 + $0x18] sm:$0xff]
  %v40 = vld [vmem:[%s0 + $0x20] sm:$0xff]
  %v41 = vld [vmem:[%s0 + $0x28] sm:$0xff]
  %v42 = vld [vmem:[%s0 + $0x30] sm:$0xff]
  %v43 = vld [vmem:[%s0 + $0x38] sm:$0xff]
  %v44 = vld [vmem:[%s0 + $0x40] sm:$0xff]
  %v45 = vld [vmem:[%s0 + $0x48] sm:$0xff]
  %v46 = vld [vmem:[%s0 + $0x50] sm:$0xff]
  %v47 = vld [vmem:[%s0 + $0x58] sm:$0xff]
  %v48 = vld [vmem:[%s0 + $0x60] sm:$0xff]
  %v49 = vld [vmem:[%s0 + $0x68] sm:$0xff]
  %v50 = vld [vmem:[%s0 + $0x70] sm:$0xff]
  %v51 = vld [vmem:[%s0 + $0x78] sm:$0xff]
  %v52 = vld [vmem:[%s0 + $0x80] sm:$0xff]
  %v53 = vld [vmem:[%s0 + $0x88] sm:$0xff]
  %v54 = vld [vmem:[%s0 + $0x90] sm:$0xff]
  %v55 = vld [vmem:[%s0 + $0x98] sm:$0xff]
  %v56 = vld [vmem:[%s0 + $0xa0] sm:$0xff]
  %v57 = vld [vmem:[%s0 + $0xa8] sm:$0xff]
  %v58 = vld [vmem:[%s0 + $0xb0] sm:$0xff]
  %v59 = vld [vmem:[%s0 + $0xb8] sm:$0xff]
  %v60 = vld [vmem:[%s0 + $0xc0] sm:$0xff]
  %v61 = vld [vmem:[%s0 + $0xc8] sm:$0xff]
  %v62 = vld [vmem:[%s0 + $0xd0] sm:$0xff]
  %v63 = vld [vmem:[%s0 + $0xd8] sm:$0xff]
  %v64 = vld [vmem:[%s1] sm:$0xff]
  %v65 = vld [vmem:[%s1 + $0x8] sm:$0xff]
  %v66 = vld [vmem:[%s1 + $0x10] sm:$0xff]
  %v67 = vld [vmem:[%s1 + $0x18] sm:$0xff]
  %v68 = vld [vmem:[%s1 + $0x20] sm:$0xff]
  %v69 = vld [vmem:[%s1 + $0x28] sm:$0xff]
  %v70 = vld [vmem:[%s1 + $0x30] sm:$0xff]
  %v71 = vld [vmem:[%s1 + $0x38] sm:$0xff]
  %v72 = vld [vmem:[%s1 + $0x40] sm:$0xff]
  %v73 = vld [vmem:[%s1 + $0x48] sm:$0xff]
  %v74 = vld [vmem:[%s1 + $0x50] sm:$0xff]
  %v75 = vld [vmem:[%s1 + $0x58] sm:$0xff]
  %v76 = vld [vmem:[%s1 + $0x60] sm:$0xff]
  %v77 = vld [vmem:[%s1 + $0x68] sm:$0xff]
  %v78 = vld [vmem:[%s1 + $0x70] sm:$0xff]
  %v79 = vld [vmem:[%s1 + $0x78] sm:$0xff]
  %v80 = vld [vmem:[%s1 + $0x80] sm:$0xff]
  %v81 = vld [vmem:[%s1 + $0x88] sm:$0xff]
  %v82 = vld [vmem:[%s1 + $0x90] sm:$0xff]
  %v83 = vld [vmem:[%s1 + $0x98] sm:$0xff]
  %v84 = vld [vmem:[%s1 + $0xa0] sm:$0xff]
  %v85 = vld [vmem:[%s1 + $0xa8] sm:$0x3]
  %v86 = vld [vmem:[%s2] sm:$0x1]
  %v88 = vlaneseq
  %v89 = vshrl.u32 %v88, 7
  %v90 = vsub.s32 0, %v89
  %v91 = vrot.slane %v86, %v90
  %vm93 = vcmask 343040
  %v95 = vsel %vm93, %v37, 0
  %v98 = vsel %vm93, %v39, 0
  %v101 = vsel %vm93, %v41, 0
  %v104 = vsel %vm93, %v43, 0
  %v107 = vsel %vm93, %v45, 0
  %v110 = vsel %vm93, %v47, 0
  %v113 = vsel %vm93, %v49, 0
  %v116 = vsel %vm93, %v51, 0
  %v119 = vsel %vm93, %v53, 0
  %v122 = vsel %vm93, %v55, 0
  %v125 = vsel %vm93, %v57, 0
  %v128 = vsel %vm93, %v59, 0
  %v131 = vsel %vm93, %v61, 0
  %v134 = vsel %vm93, %v63, 0
  %vm136 = vcmask 1041408
  %v138 = vsel %vm136, %v85, 0
  %140 = vmatprep.subr.mxu0 0.0
  %141 = vmatpush1.msra.mxu0 %v79
  %142 = vmatprep.subr.mxu0 0.0
  %143 = vmatpush1.msra.mxu0 %v78
  %144 = vmatprep.subr.mxu0 0.0
  %145 = vmatpush1.msra.mxu0 %v77
  %146 = vmatprep.subr.mxu0 0.0
  %147 = vmatpush1.msra.mxu0 %v76
  %148 = vmatprep.subr.mxu0 0.0
  %149 = vmatpush1.msra.mxu0 %v75
  %150 = vmatprep.subr.mxu0 0.0
  %151 = vmatpush1.msra.mxu0 %v74
  %152 = vmatprep.subr.mxu0 0.0
  %153 = vmatpush1.msra.mxu0 %v73
  %154 = vmatprep.subr.mxu0 0.0
  %155 = vmatpush1.msra.mxu0 %v72
  %156 = vmatprep.subr.mxu0 0.0
  %157 = vmatpush1.msra.mxu0 %v71
  %158 = vmatprep.subr.mxu0 0.0
  %159 = vmatpush1.msra.mxu0 %v70
  %160 = vmatprep.subr.mxu0 0.0
  %161 = vmatpush1.msra.mxu0 %v69
  %162 = vmatprep.subr.mxu0 0.0
  %163 = vmatpush1.msra.mxu0 %v68
  %164 = vmatprep.subr.mxu0 0.0
  %165 = vmatpush1.msra.mxu0 %v67
  %166 = vmatprep.subr.mxu0 0.0
  %167 = vmatpush1.msra.mxu0 %v66
  %168 = vmatprep.subr.mxu0 0.0
  %169 = vmatpush1.msra.mxu0 %v65
  %170 = vmatprep.subr.mxu0 0.0
  %171 = vmatpush1.msra.mxu0 %v64
  %172 = vmatprep.subr.mxu0 0.0
  %173 = vmatpush2.msra.mxu0 0.0
  %174 = vmatprep.subr.mxu0 0.0
  %175 = vmatpush2.msra.mxu0 0.0
  %176 = vmatprep.subr.mxu0 0.0
  %177 = vmatpush2.msra.mxu0 0.0
  %178 = vmatprep.subr.mxu0 0.0
  %179 = vmatpush2.msra.mxu0 0.0
  %180 = vmatprep.subr.mxu0 0.0
  %181 = vmatpush2.msra.mxu0 0.0
  %182 = vmatprep.subr.mxu0 0.0
  %183 = vmatpush2.msra.mxu0 0.0
  %184 = vmatprep.subr.mxu0 0.0
  %185 = vmatpush2.msra.mxu0 0.0
  %186 = vmatprep.subr.mxu0 0.0
  %187 = vmatpush2.msra.mxu0 0.0
  %188 = vmatprep.subr.mxu0 0.0
  %189 = vmatpush2.msra.mxu0 0.0
  %190 = vmatprep.subr.mxu0 0.0
  %191 = vmatpush2.msra.mxu0 0.0
  %192 = vmatprep.subr.mxu0 0.0
  %193 = vmatpush2.msra.mxu0 %v138
  %194 = vmatprep.subr.mxu0 0.0
  %195 = vmatpush2.msra.mxu0 %v84
  %196 = vmatprep.subr.mxu0 0.0
  %197 = vmatpush2.msra.mxu0 %v83
  %198 = vmatprep.subr.mxu0 0.0
  %199 = vmatpush2.msra.mxu0 %v82
  %200 = vmatprep.subr.mxu0 0.0
  %201 = vmatpush2.msra.mxu0 %v81
  %202 = vmatprep.subr.mxu0 0.0
  %203 = vmatpush2.msra.mxu0 %v80
  %204 = vmatprep.mubr.f32.mxu0 %v95
  %205 = vmatmul.mubr.f32.gmra.mxu0 %v36
  %v206 = vpop.f32.mrf.mxu0
  %v207 = vadd.f32 %v91, %v206
  %v208 = vpop.f32.mrf.mxu0
  %209 = vmatprep.mubr.f32.mxu0 %v98
  %210 = vmatmul.mubr.f32.gmra.mxu0 %v38
  %v211 = vpop.f32.mrf.mxu0
  %v212 = vadd.f32 %v91, %v211
  %v213 = vpop.f32.mrf.mxu0
  %214 = vmatprep.mubr.f32.mxu0 %v101
  %215 = vmatmul.mubr.f32.gmra.mxu0 %v40
  %v216 = vpop.f32.mrf.mxu0
  %v217 = vadd.f32 %v91, %v216
  %v218 = vpop.f32.mrf.mxu0
  %219 = vmatprep.mubr.f32.mxu0 %v104
  %220 = vmatmul.mubr.f32.gmra.mxu0 %v42
  %v221 = vpop.f32.mrf.mxu0
  %v222 = vadd.f32 %v91, %v221
  %v223 = vpop.f32.mrf.mxu0
  %224 = vmatprep.mubr.f32.mxu0 %v107
  %225 = vmatmul.mubr.f32.gmra.mxu0 %v44
  %v226 = vpop.f32.mrf.mxu0
  %v227 = vadd.f32 %v91, %v226
  %v228 = vpop.f32.mrf.mxu0
  %229 = vmatprep.mubr.f32.mxu0 %v110
  %230 = vmatmul.mubr.f32.gmra.mxu0 %v46
  %v231 = vpop.f32.mrf.mxu0
  %v232 = vadd.f32 %v91, %v231
  %v233 = vpop.f32.mrf.mxu0
  %234 = vmatprep.mubr.f32.mxu0 %v113
  %235 = vmatmul.mubr.f32.gmra.mxu0 %v48
  %v236 = vpop.f32.mrf.mxu0
  %v237 = vadd.f32 %v91, %v236
  %v238 = vpop.f32.mrf.mxu0
  %239 = vmatprep.mubr.f32.mxu0 %v116
  %240 = vmatmul.mubr.f32.gmra.mxu0 %v50
  %v241 = vpop.f32.mrf.mxu0
  %v242 = vadd.f32 %v91, %v241
  %v243 = vpop.f32.mrf.mxu0
  %244 = vmatprep.mubr.f32.mxu0 %v119
  %245 = vmatmul.mubr.f32.gmra.mxu0 %v52
  %v246 = vpop.f32.mrf.mxu0
  %v247 = vadd.f32 %v91, %v246
  %v248 = vpop.f32.mrf.mxu0
  %249 = vmatprep.mubr.f32.mxu0 %v122
  %250 = vmatmul.mubr.f32.gmra.mxu0 %v54
  %v251 = vpop.f32.mrf.mxu0
  %v252 = vadd.f32 %v91, %v251
  %v253 = vpop.f32.mrf.mxu0
  %254 = vmatprep.mubr.f32.mxu0 %v125
  %255 = vmatmul.mubr.f32.gmra.mxu0 %v56
  %v256 = vpop.f32.mrf.mxu0
  %v257 = vadd.f32 %v91, %v256
  %v258 = vpop.f32.mrf.mxu0
  %259 = vmatprep.mubr.f32.mxu0 %v128
  %260 = vmatmul.mubr.f32.gmra.mxu0 %v58
  %v261 = vpop.f32.mrf.mxu0
  %v262 = vadd.f32 %v91, %v261
  %v263 = vpop.f32.mrf.mxu0
  %264 = vmatprep.mubr.f32.mxu0 %v131
  %265 = vmatmul.mubr.f32.gmra.mxu0 %v60
  %v266 = vpop.f32.mrf.mxu0
  %v267 = vadd.f32 %v91, %v266
  %v268 = vpop.f32.mrf.mxu0
  %269 = vmatprep.mubr.f32.mxu0 %v134
  %270 = vmatmul.mubr.f32.gmra.mxu0 %v62
  %v271 = vpop.f32.mrf.mxu0
  %v272 = vadd.f32 %v91, %v271
  %v273 = vpop.f32.mrf.mxu0
  %274 = vdwg.mxu0
  %vm275 = vcmask 523264
  %276 = vst.msk [vmem:[#allocation2] sm:$0xff] %vm275, %v207
  %277 = vst.msk [vmem:[#allocation2 + $0x8] sm:$0xff] %vm275, %v212
  %278 = vst.msk [vmem:[#allocation2 + $0x10] sm:$0xff] %vm275, %v217
  %279 = vst.msk [vmem:[#allocation2 + $0x18] sm:$0xff] %vm275, %v222
  %280 = vst.msk [vmem:[#allocation2 + $0x20] sm:$0xff] %vm275, %v227
  %281 = vst.msk [vmem:[#allocation2 + $0x28] sm:$0xff] %vm275, %v232
  %282 = vst.msk [vmem:[#allocation2 + $0x30] sm:$0xff] %vm275, %v237
  %283 = vst.msk [vmem:[#allocation2 + $0x38] sm:$0xff] %vm275, %v242
  %284 = vst.msk [vmem:[#allocation2 + $0x40] sm:$0xff] %vm275, %v247
  %285 = vst.msk [vmem:[#allocation2 + $0x48] sm:$0xff] %vm275, %v252
  %286 = vst.msk [vmem:[#allocation2 + $0x50] sm:$0xff] %vm275, %v257
  %287 = vst.msk [vmem:[#allocation2 + $0x58] sm:$0xff] %vm275, %v262
  %288 = vst.msk [vmem:[#allocation2 + $0x60] sm:$0xff] %vm275, %v267
  %289 = vst.msk [vmem:[#allocation2 + $0x68] sm:$0xff] %vm275, %v272
  %v290 = vld [vmem:[#allocation2] sm:$0xff]
  %292 = vrot.lane.b32.xlu0 %v290, 96
  %v293 = vpop.permute.xlu0 %292
  %v295 = vmax.f32 %v290, %v293
  %vm296 = vcmask 261120
  %297 = vst.msk [vmem:[#allocation3] sm:$0xff] %vm296, %v295
  %v298 = vld [vmem:[#allocation2 + $0x8] sm:$0xff]
  %v299 = vld [vmem:[#allocation2 + $0x10] sm:$0xff]
  %v300 = vmax.f32 %v298, %v299
  %302 = vrot.lane.b32.xlu0 %v300, 96
  %v303 = vpop.permute.xlu0 %302
  %v305 = vmax.f32 %v300, %v303
  %306 = vst.msk [vmem:[#allocation3 + $0x8] sm:$0xff] %vm296, %v305
  %v307 = vld [vmem:[#allocation2 + $0x18] sm:$0xff]
  %v308 = vld [vmem:[#allocation2 + $0x20] sm:$0xff]
  %v309 = vmax.f32 %v307, %v308
  %311 = vrot.lane.b32.xlu0 %v309, 96
  %v312 = vpop.permute.xlu0 %311
  %v314 = vmax.f32 %v309, %v312
  %315 = vst.msk [vmem:[#allocation3 + $0x10] sm:$0xff] %vm296, %v314
  %v316 = vld [vmem:[#allocation2 + $0x28] sm:$0xff]
  %v317 = vld [vmem:[#allocation2 + $0x30] sm:$0xff]
  %v318 = vmax.f32 %v316, %v317
  %320 = vrot.lane.b32.xlu0 %v318, 96
  %v321 = vpop.permute.xlu0 %320
  %v323 = vmax.f32 %v318, %v321
  %324 = vst.msk [vmem:[#allocation3 + $0x18] sm:$0xff] %vm296, %v323
  %v325 = vld [vmem:[#allocation2 + $0x38] sm:$0xff]
  %v326 = vld [vmem:[#allocation2 + $0x40] sm:$0xff]
  %v327 = vmax.f32 %v325, %v326
  %329 = vrot.lane.b32.xlu0 %v327, 96
  %v330 = vpop.permute.xlu0 %329
  %v332 = vmax.f32 %v327, %v330
  %333 = vst.msk [vmem:[#allocation3 + $0x20] sm:$0xff] %vm296, %v332
  %v334 = vld [vmem:[#allocation2 + $0x48] sm:$0xff]
  %v335 = vld [vmem:[#allocation2 + $0x50] sm:$0xff]
  %v336 = vmax.f32 %v334, %v335
  %338 = vrot.lane.b32.xlu0 %v336, 96
  %v339 = vpop.permute.xlu0 %338
  %v341 = vmax.f32 %v336, %v339
  %342 = vst.msk [vmem:[#allocation3 + $0x28] sm:$0xff] %vm296, %v341
  %v343 = vld [vmem:[#allocation2 + $0x58] sm:$0xff]
  %v344 = vld [vmem:[#allocation2 + $0x60] sm:$0xff]
  %v345 = vmax.f32 %v343, %v344
  %347 = vrot.lane.b32.xlu0 %v345, 96
  %v348 = vpop.permute.xlu0 %347
  %v350 = vmax.f32 %v345, %v348
  %351 = vst.msk [vmem:[#allocation3 + $0x30] sm:$0xff] %vm296, %v350
  %v352 = vld [vmem:[#allocation2 + $0x68] sm:$0xff]
  %354 = vrot.lane.b32.xlu0 %v352, 96
  %v355 = vpop.permute.xlu0 %354
  %v357 = vmax.f32 %v352, %v355
  %358 = vst.msk [vmem:[#allocation3 + $0x38] sm:$0xff] %vm296, %v357
  %v359 = vld [vmem:[#allocation3] sm:$0xff]
  %v360 = vld [vmem:[#allocation3 + $0x8] sm:$0xff]
  %v361 = vld [vmem:[#allocation3 + $0x10] sm:$0xff]
  %v362 = vld [vmem:[#allocation3 + $0x18] sm:$0xff]
  %v363 = vld [vmem:[#allocation3 + $0x20] sm:$0xff]
  %v364 = vld [vmem:[#allocation3 + $0x28] sm:$0xff]
  %v365 = vld [vmem:[#allocation3 + $0x30] sm:$0xff]
  %v366 = vld [vmem:[#allocation3 + $0x38] sm:$0xff]
  %v367 = vld [vmem:[%s3] sm:$0xff]
  %v368 = vld [vmem:[%s3 + $0x8] sm:$0xff]
  %v369 = vld [vmem:[%s3 + $0x10] sm:$0xff]
  %v370 = vld [vmem:[%s3 + $0x18] sm:$0xff]
  %v371 = vld [vmem:[%s3 + $0x20] sm:$0xff]
  %v372 = vld [vmem:[%s3 + $0x28] sm:$0xff]
  %v373 = vld [vmem:[%s3 + $0x30] sm:$0xff]
  %v374 = vld [vmem:[%s3 + $0x38] sm:$0xff]
  %v375 = vld [vmem:[%s5] sm:$0x3]
  %v377 = vlaneseq
  %v378 = vshrl.u32 %v377, 7
  %v379 = vsub.s32 0, %v378
  %v380 = vrot.slane %v375, %v379
  %v381 = vlaneseq
  %v382 = vshrl.u32 %v381, 7
  %v383 = vsub.s32 1, %v382
  %v384 = vrot.slane %v375, %v383
  %v388 = vsel %vm296, %v359, 0
  %v391 = vsel %vm296, %v360, 0
  %v394 = vsel %vm296, %v361, 0
  %v397 = vsel %vm296, %v362, 0
  %v400 = vsel %vm296, %v363, 0
  %v403 = vsel %vm296, %v364, 0
  %v406 = vsel %vm296, %v365, 0
  %v409 = vsel %vm296, %v366, 0
  %411 = vmatprep.subr.mxu0 0.0
  %412 = vmatpush1.msra.mxu0 0.0
  %413 = vmatprep.subr.mxu0 0.0
  %414 = vmatpush1.msra.mxu0 0.0
  %415 = vmatprep.subr.mxu0 0.0
  %416 = vmatpush1.msra.mxu0 0.0
  %417 = vmatprep.subr.mxu0 0.0
  %418 = vmatpush1.msra.mxu0 0.0
  %419 = vmatprep.subr.mxu0 0.0
  %420 = vmatpush1.msra.mxu0 0.0
  %421 = vmatprep.subr.mxu0 0.0
  %422 = vmatpush1.msra.mxu0 0.0
  %423 = vmatprep.subr.mxu0 0.0
  %424 = vmatpush1.msra.mxu0 0.0
  %425 = vmatprep.subr.mxu0 0.0
  %426 = vmatpush1.msra.mxu0 0.0
  %427 = vmatprep.subr.mxu0 0.0
  %428 = vmatpush1.msra.mxu0 0.0
  %429 = vmatprep.subr.mxu0 0.0
  %430 = vmatpush1.msra.mxu0 0.0
  %431 = vmatprep.subr.mxu0 0.0
  %432 = vmatpush1.msra.mxu0 0.0
  %433 = vmatprep.subr.mxu0 0.0
  %434 = vmatpush1.msra.mxu0 0.0
  %435 = vmatprep.subr.mxu0 %v374
  %436 = vmatpush1.msra.mxu0 %v373
  %437 = vmatprep.subr.mxu0 %v372
  %438 = vmatpush1.msra.mxu0 %v371
  %439 = vmatprep.subr.mxu0 %v370
  %440 = vmatpush1.msra.mxu0 %v369
  %441 = vmatprep.subr.mxu0 %v368
  %442 = vmatpush1.msra.mxu0 %v367
  %443 = vmatprep.subr.mxu0 0.0
  %444 = vmatpush2.msra.mxu0 0.0
  %445 = vmatprep.subr.mxu0 0.0
  %446 = vmatpush2.msra.mxu0 0.0
  %447 = vmatprep.subr.mxu0 0.0
  %448 = vmatpush2.msra.mxu0 0.0
  %449 = vmatprep.subr.mxu0 0.0
  %450 = vmatpush2.msra.mxu0 0.0
  %451 = vmatprep.subr.mxu0 0.0
  %452 = vmatpush2.msra.mxu0 0.0
  %453 = vmatprep.subr.mxu0 0.0
  %454 = vmatpush2.msra.mxu0 0.0
  %455 = vmatprep.subr.mxu0 0.0
  %456 = vmatpush2.msra.mxu0 0.0
  %457 = vmatprep.subr.mxu0 0.0
  %458 = vmatpush2.msra.mxu0 0.0
  %459 = vmatprep.subr.mxu0 0.0
  %460 = vmatpush2.msra.mxu0 0.0
  %461 = vmatprep.subr.mxu0 0.0
  %462 = vmatpush2.msra.mxu0 0.0
  %463 = vmatprep.subr.mxu0 0.0
  %464 = vmatpush2.msra.mxu0 0.0
  %465 = vmatprep.subr.mxu0 0.0
  %466 = vmatpush2.msra.mxu0 0.0
  %467 = vmatprep.subr.mxu0 0.0
  %468 = vmatpush2.msra.mxu0 0.0
  %469 = vmatprep.subr.mxu0 0.0
  %470 = vmatpush2.msra.mxu0 0.0
  %471 = vmatprep.subr.mxu0 0.0
  %472 = vmatpush2.msra.mxu0 0.0
  %473 = vmatprep.subr.mxu0 0.0
  %474 = vmatpush2.msra.mxu0 0.0
  %475 = vmatprep.mubr.f32.mxu0 0.0
  %476 = vmatmul.mubr.f32.gmra.mxu0 %v388
  %v477 = vpop.f32.mrf.mxu0
  %v478 = vadd.f32 %v380, %v477
  %v479 = vpop.f32.mrf.mxu0
  %v480 = vadd.f32 %v384, %v479
  %481 = vmatprep.mubr.f32.mxu0 0.0
  %482 = vmatmul.mubr.f32.gmra.mxu0 %v391
  %v483 = vpop.f32.mrf.mxu0
  %v484 = vadd.f32 %v380, %v483
  %v485 = vpop.f32.mrf.mxu0
  %v486 = vadd.f32 %v384, %v485
  %487 = vmatprep.mubr.f32.mxu0 0.0
  %488 = vmatmul.mubr.f32.gmra.mxu0 %v394
  %v489 = vpop.f32.mrf.mxu0
  %v490 = vadd.f32 %v380, %v489
  %v491 = vpop.f32.mrf.mxu0
  %v492 = vadd.f32 %v384, %v491
  %493 = vmatprep.mubr.f32.mxu0 0.0
  %494 = vmatmul.mubr.f32.gmra.mxu0 %v397
  %v495 = vpop.f32.mrf.mxu0
  %v496 = vadd.f32 %v380, %v495
  %v497 = vpop.f32.mrf.mxu0
  %v498 = vadd.f32 %v384, %v497
  %499 = vmatprep.mubr.f32.mxu0 0.0
  %500 = vmatmul.mubr.f32.gmra.mxu0 %v400
  %v501 = vpop.f32.mrf.mxu0
  %v502 = vadd.f32 %v380, %v501
  %v503 = vpop.f32.mrf.mxu0
  %v504 = vadd.f32 %v384, %v503
  %505 = vmatprep.mubr.f32.mxu0 0.0
  %506 = vmatmul.mubr.f32.gmra.mxu0 %v403
  %v507 = vpop.f32.mrf.mxu0
  %v508 = vadd.f32 %v380, %v507
  %v509 = vpop.f32.mrf.mxu0
  %v510 = vadd.f32 %v384, %v509
  %511 = vmatprep.mubr.f32.mxu0 0.0
  %512 = vmatmul.mubr.f32.gmra.mxu0 %v406
  %v513 = vpop.f32.mrf.mxu0
  %v514 = vadd.f32 %v380, %v513
  %v515 = vpop.f32.mrf.mxu0
  %v516 = vadd.f32 %v384, %v515
  %517 = vmatprep.mubr.f32.mxu0 0.0
  %518 = vmatmul.mubr.f32.gmra.mxu0 %v409
  %v519 = vpop.f32.mrf.mxu0
  %v520 = vadd.f32 %v380, %v519
  %v521 = vpop.f32.mrf.mxu0
  %v522 = vadd.f32 %v384, %v521
  %523 = vdwg.mxu0
  %524 = vst [vmem:[#allocation4] sm:$0xff] %v478
  %525 = vst [vmem:[#allocation4 + $0x8] sm:$0xff] %v480
  %526 = vst [vmem:[#allocation4 + $0x10] sm:$0xff] %v484
  %527 = vst [vmem:[#allocation4 + $0x18] sm:$0xff] %v486
  %528 = vst [vmem:[#allocation4 + $0x20] sm:$0xff] %v490
  %529 = vst [vmem:[#allocation4 + $0x28] sm:$0xff] %v492
  %530 = vst [vmem:[#allocation4 + $0x30] sm:$0xff] %v496
  %531 = vst [vmem:[#allocation4 + $0x38] sm:$0xff] %v498
  %532 = vst [vmem:[#allocation4 + $0x40] sm:$0xff] %v502
  %533 = vst [vmem:[#allocation4 + $0x48] sm:$0xff] %v504
  %534 = vst [vmem:[#allocation4 + $0x50] sm:$0xff] %v508
  %535 = vst [vmem:[#allocation4 + $0x58] sm:$0xff] %v510
  %536 = vst [vmem:[#allocation4 + $0x60] sm:$0xff] %v514
  %537 = vst [vmem:[#allocation4 + $0x68] sm:$0xff] %v516
  %538 = vst [vmem:[#allocation4 + $0x70] sm:$0xff] %v520
  %539 = vst [vmem:[#allocation4 + $0x78] sm:$0xff] %v522
  %v540 = vld [vmem:[%s4] sm:$0xff]
  %v541 = vld [vmem:[%s4 + $0x8] sm:$0xff]
  %v542 = vld [vmem:[%s4 + $0x10] sm:$0xff]
  %v543 = vld [vmem:[%s4 + $0x18] sm:$0xff]
  %v544 = vld [vmem:[%s4 + $0x20] sm:$0xff]
  %v545 = vld [vmem:[%s4 + $0x28] sm:$0xff]
  %v546 = vld [vmem:[%s4 + $0x30] sm:$0xff]
  %v547 = vld [vmem:[%s4 + $0x38] sm:$0xff]
  %v548 = vld [vmem:[%s4 + $0x40] sm:$0xff]
  %v549 = vld [vmem:[%s4 + $0x48] sm:$0xff]
  %v550 = vld [vmem:[%s4 + $0x50] sm:$0xff]
  %v551 = vld [vmem:[%s4 + $0x58] sm:$0xff]
  %v552 = vld [vmem:[%s4 + $0x60] sm:$0xff]
  %v553 = vld [vmem:[%s4 + $0x68] sm:$0xff]
  %v554 = vld [vmem:[%s4 + $0x70] sm:$0xff]
  %v555 = vld [vmem:[%s4 + $0x78] sm:$0xff]
  %v556 = vld [vmem:[%s7] sm:$0x3]
  %vm557 = vcmp.ne.f32.partialorder %v556, 0.0
  %v558 = vld [vmem:[%s6] sm:$0x1]
  %v560 = vlaneseq
  %v561 = vshrl.u32 %v560, 7
  %v562 = vsub.s32 0, %v561
  %v563 = vrot.slane %v558, %v562
  %v565 = vtanh.pop %v563
  %s566 = smul.u32 0, 2
  %s567 = smul.addr %s566, 8
  %s568 = scalar_lea.vmem [#allocation4], %s567
  %v569 = vld [vmem:[%s568] sm:$0xff]
  %v570 = vld [vmem:[%s568 + $0x8] sm:$0xff]
  %s571 = smul.u32 7, 2
  %s572 = smul.addr %s571, 8
  %s573 = scalar_lea.vmem [#allocation4], %s572
  %v574 = vld [vmem:[%s573] sm:$0xff]
  %v575 = vld [vmem:[%s573 + $0x8] sm:$0xff]
  %v576 = vsel %vm557, 1, 0
  %v577 = vlaneseq
  %v578 = vshrl.u32 %v577, 7
  %v579 = vsub.s32 0, %v578
  %v580 = vrot.slane %v576, %v579
  %v581 = vlaneseq
  %v582 = vshrl.u32 %v581, 7
  %v583 = vsub.s32 1, %v582
  %v584 = vrot.slane %v576, %v583
  %vm585 = vcmp.eq.s32.totalorder %v580, 1
  %vm586 = vcmp.eq.s32.totalorder %v584, 1
  %v587 = vsel %vm585, %v569, %v574
  %v588 = vsel %vm586, %v570, %v575
  %v590 = vsel %vm275, %v565, 0
  %592 = vmatprep.subr.mxu0 0.0
  %593 = vmatpush1.msra.mxu0 0.0
  %594 = vmatprep.subr.mxu0 0.0
  %595 = vmatpush1.msra.mxu0 0.0
  %596 = vmatprep.subr.mxu0 0.0
  %597 = vmatpush1.msra.mxu0 0.0
  %598 = vmatprep.subr.mxu0 0.0
  %599 = vmatpush1.msra.mxu0 0.0
  %600 = vmatprep.subr.mxu0 0.0
  %601 = vmatpush1.msra.mxu0 0.0
  %602 = vmatprep.subr.mxu0 0.0
  %603 = vmatpush1.msra.mxu0 0.0
  %604 = vmatprep.subr.mxu0 0.0
  %605 = vmatpush1.msra.mxu0 0.0
  %606 = vmatprep.subr.mxu0 0.0
  %607 = vmatpush1.msra.mxu0 0.0
  %608 = vmatprep.subr.mxu0 %v555
  %609 = vmatpush1.msra.mxu0 %v554
  %610 = vmatprep.subr.mxu0 %v553
  %611 = vmatpush1.msra.mxu0 %v552
  %612 = vmatprep.subr.mxu0 %v551
  %613 = vmatpush1.msra.mxu0 %v550
  %614 = vmatprep.subr.mxu0 %v549
  %615 = vmatpush1.msra.mxu0 %v548
  %616 = vmatprep.subr.mxu0 %v547
  %617 = vmatpush1.msra.mxu0 %v546
  %618 = vmatprep.subr.mxu0 %v545
  %619 = vmatpush1.msra.mxu0 %v544
  %620 = vmatprep.subr.mxu0 %v543
  %621 = vmatpush1.msra.mxu0 %v542
  %622 = vmatprep.subr.mxu0 %v541
  %623 = vmatpush1.msra.mxu0 %v540
  %624 = vmatprep.subr.mxu0 0.0
  %625 = vmatpush2.msra.mxu0 0.0
  %626 = vmatprep.subr.mxu0 0.0
  %627 = vmatpush2.msra.mxu0 0.0
  %628 = vmatprep.subr.mxu0 0.0
  %629 = vmatpush2.msra.mxu0 0.0
  %630 = vmatprep.subr.mxu0 0.0
  %631 = vmatpush2.msra.mxu0 0.0
  %632 = vmatprep.subr.mxu0 0.0
  %633 = vmatpush2.msra.mxu0 0.0
  %634 = vmatprep.subr.mxu0 0.0
  %635 = vmatpush2.msra.mxu0 0.0
  %636 = vmatprep.subr.mxu0 0.0
  %637 = vmatpush2.msra.mxu0 0.0
  %638 = vmatprep.subr.mxu0 0.0
  %639 = vmatpush2.msra.mxu0 0.0
  %640 = vmatprep.subr.mxu0 0.0
  %641 = vmatpush2.msra.mxu0 0.0
  %642 = vmatprep.subr.mxu0 0.0
  %643 = vmatpush2.msra.mxu0 0.0
  %644 = vmatprep.subr.mxu0 0.0
  %645 = vmatpush2.msra.mxu0 0.0
  %646 = vmatprep.subr.mxu0 0.0
  %647 = vmatpush2.msra.mxu0 0.0
  %648 = vmatprep.subr.mxu0 0.0
  %649 = vmatpush2.msra.mxu0 0.0
  %650 = vmatprep.subr.mxu0 0.0
  %651 = vmatpush2.msra.mxu0 0.0
  %652 = vmatprep.subr.mxu0 0.0
  %653 = vmatpush2.msra.mxu0 0.0
  %654 = vmatprep.subr.mxu0 0.0
  %655 = vmatpush2.msra.mxu0 0.0
  %656 = vmatprep.mubr.f32.mxu0 0.0
  %657 = vmatmul.mubr.f32.gmra.mxu0 %v590
  %v658 = vpop.f32.mrf.mxu0
  %v659 = vadd.f32 0.0, %v658
  %v660 = vpop.f32.mrf.mxu0
  %v661 = vadd.f32 0.0, %v660
  %662 = vdwg.mxu0
  %v663 = vadd.f32 %v587, %v659
  %v664 = vadd.f32 %v588, %v661
  %v665 = vxor.u32 %v663, 2147483648
  %v666 = vxor.u32 %v664, 2147483648
  %v667 = vmul.f32 %v665, 1.442695
  %v668 = vpow.pop %v667
  %v669 = vmul.f32 %v666, 1.442695
  %v670 = vpow.pop %v669
  %v671 = vadd.f32 %v668, 1.0
  %v672 = vadd.f32 %v670, 1.0
  %v673 = vrcp.pop %v671
  %v674 = vmul.f32 1.0, %v673
  %v675 = vrcp.pop %v672
  %v676 = vmul.f32 1.0, %v675
  %v677 = vtanh.pop %v664
  %679 = vrot.lane.b32.xlu0 %v677, 64
  %v680 = vpop.permute.xlu0 %679
  %v682 = vmul.f32 %v674, %v680
  %683 = vrot.lane.b32.xlu0 %v563, 64
  %v684 = vpop.permute.xlu0 %683
  %v686 = vmul.f32 %v674, %v684
  %688 = vrot.lane.b32.xlu0 %v686, 64
  %v689 = vpop.permute.xlu0 %688
  %v691 = vadd.f32 %v682, %v689
  %v692 = vtanh.pop %v691
  %v693 = vmul.f32 %v676, %v692
  %694 = vst.msk [vmem:[#allocation5] sm:$0xff] %vm296, %v693
  %s695 = scalar_lea.vmem [#allocation5], 56
  %vm696 = vcmask 523520
  %697 = vst.msk [vmem:[%s695] sm:$0xff] %vm696, %v693
  %s698 = smul.u32 1, 2
  %s699 = smul.addr %s698, 8
  %s700 = scalar_lea.vmem [#allocation4], %s699
  %v701 = vld [vmem:[%s700] sm:$0xff]
  %v702 = vld [vmem:[%s700 + $0x8] sm:$0xff]
  %s703 = smul.u32 6, 2
  %s704 = smul.addr %s703, 8
  %s705 = scalar_lea.vmem [#allocation4], %s704
  %v706 = vld [vmem:[%s705] sm:$0xff]
  %v707 = vld [vmem:[%s705 + $0x8] sm:$0xff]
  %v708 = vsel %vm585, %v701, %v706
  %v709 = vsel %vm586, %v702, %v707
  %v711 = vsel %vm275, %v693, 0
  %713 = vmatprep.subr.mxu0 0.0
  %714 = vmatpush1.msra.mxu0 0.0
  %715 = vmatprep.subr.mxu0 0.0
  %716 = vmatpush1.msra.mxu0 0.0
  %717 = vmatprep.subr.mxu0 0.0
  %718 = vmatpush1.msra.mxu0 0.0
  %719 = vmatprep.subr.mxu0 0.0
  %720 = vmatpush1.msra.mxu0 0.0
  %721 = vmatprep.subr.mxu0 0.0
  %722 = vmatpush1.msra.mxu0 0.0
  %723 = vmatprep.subr.mxu0 0.0
  %724 = vmatpush1.msra.mxu0 0.0
  %725 = vmatprep.subr.mxu0 0.0
  %726 = vmatpush1.msra.mxu0 0.0
  %727 = vmatprep.subr.mxu0 0.0
  %728 = vmatpush1.msra.mxu0 0.0
  %729 = vmatprep.subr.mxu0 %v555
  %730 = vmatpush1.msra.mxu0 %v554
  %731 = vmatprep.subr.mxu0 %v553
  %732 = vmatpush1.msra.mxu0 %v552
  %733 = vmatprep.subr.mxu0 %v551
  %734 = vmatpush1.msra.mxu0 %v550
  %735 = vmatprep.subr.mxu0 %v549
  %736 = vmatpush1.msra.mxu0 %v548
  %737 = vmatprep.subr.mxu0 %v547
  %738 = vmatpush1.msra.mxu0 %v546
  %739 = vmatprep.subr.mxu0 %v545
  %740 = vmatpush1.msra.mxu0 %v544
  %741 = vmatprep.subr.mxu0 %v543
  %742 = vmatpush1.msra.mxu0 %v542
  %743 = vmatprep.subr.mxu0 %v541
  %744 = vmatpush1.msra.mxu0 %v540
  %745 = vmatprep.subr.mxu0 0.0
  %746 = vmatpush2.msra.mxu0 0.0
  %747 = vmatprep.subr.mxu0 0.0
  %748 = vmatpush2.msra.mxu0 0.0
  %749 = vmatprep.subr.mxu0 0.0
  %750 = vmatpush2.msra.mxu0 0.0
  %751 = vmatprep.subr.mxu0 0.0
  %752 = vmatpush2.msra.mxu0 0.0
  %753 = vmatprep.subr.mxu0 0.0
  %754 = vmatpush2.msra.mxu0 0.0
  %755 = vmatprep.subr.mxu0 0.0
  %756 = vmatpush2.msra.mxu0 0.0
  %757 = vmatprep.subr.mxu0 0.0
  %758 = vmatpush2.msra.mxu0 0.0
  %759 = vmatprep.subr.mxu0 0.0
  %760 = vmatpush2.msra.mxu0 0.0
  %761 = vmatprep.subr.mxu0 0.0
  %762 = vmatpush2.msra.mxu0 0.0
  %763 = vmatprep.subr.mxu0 0.0
  %764 = vmatpush2.msra.mxu0 0.0
  %765 = vmatprep.subr.mxu0 0.0
  %766 = vmatpush2.msra.mxu0 0.0
  %767 = vmatprep.subr.mxu0 0.0
  %768 = vmatpush2.msra.mxu0 0.0
  %769 = vmatprep.subr.mxu0 0.0
  %770 = vmatpush2.msra.mxu0 0.0
  %771 = vmatprep.subr.mxu0 0.0
  %772 = vmatpush2.msra.mxu0 0.0
  %773 = vmatprep.subr.mxu0 0.0
  %774 = vmatpush2.msra.mxu0 0.0
  %775 = vmatprep.subr.mxu0 0.0
  %776 = vmatpush2.msra.mxu0 0.0
  %777 = vmatprep.mubr.f32.mxu0 0.0
  %778 = vmatmul.mubr.f32.gmra.mxu0 %v711
  %v779 = vpop.f32.mrf.mxu0
  %v780 = vadd.f32 0.0, %v779
  %v781 = vpop.f32.mrf.mxu0
  %v782 = vadd.f32 0.0, %v781
  %783 = vdwg.mxu0
  %v784 = vadd.f32 %v708, %v780
  %v785 = vadd.f32 %v709, %v782
  %v786 = vxor.u32 %v784, 2147483648
  %v787 = vxor.u32 %v785, 2147483648
  %v788 = vmul.f32 %v786, 1.442695
  %v789 = vpow.pop %v788
  %v790 = vmul.f32 %v787, 1.442695
  %v791 = vpow.pop %v790
  %v792 = vadd.f32 %v789, 1.0
  %v793 = vadd.f32 %v791, 1.0
  %v794 = vrcp.pop %v792
  %v795 = vmul.f32 1.0, %v794
  %v796 = vrcp.pop %v793
  %v797 = vmul.f32 1.0, %v796
  %v798 = vtanh.pop %v785
  %800 = vrot.lane.b32.xlu0 %v798, 64
  %v801 = vpop.permute.xlu0 %800
  %v803 = vmul.f32 %v795, %v801
  %805 = vrot.lane.b32.xlu0 %v691, 64
  %v806 = vpop.permute.xlu0 %805
  %v808 = vmul.f32 %v795, %v806
  %810 = vrot.lane.b32.xlu0 %v808, 64
  %v811 = vpop.permute.xlu0 %810
  %v813 = vadd.f32 %v803, %v811
  %v814 = vtanh.pop %v813
  %v815 = vmul.f32 %v797, %v814
  %s816 = scalar_lea.vmem [#allocation5], 8
  %817 = vst.msk [vmem:[%s816] sm:$0xff] %vm296, %v815
  %s818 = scalar_lea.vmem [#allocation5], 48
  %819 = vst.msk [vmem:[%s818] sm:$0xff] %vm696, %v815
  %s820 = smul.u32 2, 2
  %s821 = smul.addr %s820, 8
  %s822 = scalar_lea.vmem [#allocation4], %s821
  %v823 = vld [vmem:[%s822] sm:$0xff]
  %v824 = vld [vmem:[%s822 + $0x8] sm:$0xff]
  %s825 = smul.u32 5, 2
  %s826 = smul.addr %s825, 8
  %s827 = scalar_lea.vmem [#allocation4], %s826
  %v828 = vld [vmem:[%s827] sm:$0xff]
  %v829 = vld [vmem:[%s827 + $0x8] sm:$0xff]
  %v830 = vsel %vm585, %v823, %v828
  %v831 = vsel %vm586, %v824, %v829
  %v833 = vsel %vm275, %v815, 0
  %835 = vmatprep.subr.mxu0 0.0
  %836 = vmatpush1.msra.mxu0 0.0
  %837 = vmatprep.subr.mxu0 0.0
  %838 = vmatpush1.msra.mxu0 0.0
  %839 = vmatprep.subr.mxu0 0.0
  %840 = vmatpush1.msra.mxu0 0.0
  %841 = vmatprep.subr.mxu0 0.0
  %842 = vmatpush1.msra.mxu0 0.0
  %843 = vmatprep.subr.mxu0 0.0
  %844 = vmatpush1.msra.mxu0 0.0
  %845 = vmatprep.subr.mxu0 0.0
  %846 = vmatpush1.msra.mxu0 0.0
  %847 = vmatprep.subr.mxu0 0.0
  %848 = vmatpush1.msra.mxu0 0.0
  %849 = vmatprep.subr.mxu0 0.0
  %850 = vmatpush1.msra.mxu0 0.0
  %851 = vmatprep.subr.mxu0 %v555
  %852 = vmatpush1.msra.mxu0 %v554
  %853 = vmatprep.subr.mxu0 %v553
  %854 = vmatpush1.msra.mxu0 %v552
  %855 = vmatprep.subr.mxu0 %v551
  %856 = vmatpush1.msra.mxu0 %v550
  %857 = vmatprep.subr.mxu0 %v549
  %858 = vmatpush1.msra.mxu0 %v548
  %859 = vmatprep.subr.mxu0 %v547
  %860 = vmatpush1.msra.mxu0 %v546
  %861 = vmatprep.subr.mxu0 %v545
  %862 = vmatpush1.msra.mxu0 %v544
  %863 = vmatprep.subr.mxu0 %v543
  %864 = vmatpush1.msra.mxu0 %v542
  %865 = vmatprep.subr.mxu0 %v541
  %866 = vmatpush1.msra.mxu0 %v540
  %867 = vmatprep.subr.mxu0 0.0
  %868 = vmatpush2.msra.mxu0 0.0
  %869 = vmatprep.subr.mxu0 0.0
  %870 = vmatpush2.msra.mxu0 0.0
  %871 = vmatprep.subr.mxu0 0.0
  %872 = vmatpush2.msra.mxu0 0.0
  %873 = vmatprep.subr.mxu0 0.0
  %874 = vmatpush2.msra.mxu0 0.0
  %875 = vmatprep.subr.mxu0 0.0
  %876 = vmatpush2.msra.mxu0 0.0
  %877 = vmatprep.subr.mxu0 0.0
  %878 = vmatpush2.msra.mxu0 0.0
  %879 = vmatprep.subr.mxu0 0.0
  %880 = vmatpush2.msra.mxu0 0.0
  %881 = vmatprep.subr.mxu0 0.0
  %882 = vmatpush2.msra.mxu0 0.0
  %883 = vmatprep.subr.mxu0 0.0
  %884 = vmatpush2.msra.mxu0 0.0
  %885 = vmatprep.subr.mxu0 0.0
  %886 = vmatpush2.msra.mxu0 0.0
  %887 = vmatprep.subr.mxu0 0.0
  %888 = vmatpush2.msra.mxu0 0.0
  %889 = vmatprep.subr.mxu0 0.0
  %890 = vmatpush2.msra.mxu0 0.0
  %891 = vmatprep.subr.mxu0 0.0
  %892 = vmatpush2.msra.mxu0 0.0
  %893 = vmatprep.subr.mxu0 0.0
  %894 = vmatpush2.msra.mxu0 0.0
  %895 = vmatprep.subr.mxu0 0.0
  %896 = vmatpush2.msra.mxu0 0.0
  %897 = vmatprep.subr.mxu0 0.0
  %898 = vmatpush2.msra.mxu0 0.0
  %899 = vmatprep.mubr.f32.mxu0 0.0
  %900 = vmatmul.mubr.f32.gmra.mxu0 %v833
  %v901 = vpop.f32.mrf.mxu0
  %v902 = vadd.f32 0.0, %v901
  %v903 = vpop.f32.mrf.mxu0
  %v904 = vadd.f32 0.0, %v903
  %905 = vdwg.mxu0
  %v906 = vadd.f32 %v830, %v902
  %v907 = vadd.f32 %v831, %v904
  %v908 = vxor.u32 %v906, 2147483648
  %v909 = vxor.u32 %v907, 2147483648
  %v910 = vmul.f32 %v908, 1.442695
  %v911 = vpow.pop %v910
  %v912 = vmul.f32 %v909, 1.442695
  %v913 = vpow.pop %v912
  %v914 = vadd.f32 %v911, 1.0
  %v915 = vadd.f32 %v913, 1.0
  %v916 = vrcp.pop %v914
  %v917 = vmul.f32 1.0, %v916
  %v918 = vrcp.pop %v915
  %v919 = vmul.f32 1.0, %v918
  %v920 = vtanh.pop %v907
  %922 = vrot.lane.b32.xlu0 %v920, 64
  %v923 = vpop.permute.xlu0 %922
  %v925 = vmul.f32 %v917, %v923
  %927 = vrot.lane.b32.xlu0 %v813, 64
  %v928 = vpop.permute.xlu0 %927
  %v930 = vmul.f32 %v917, %v928
  %932 = vrot.lane.b32.xlu0 %v930, 64
  %v933 = vpop.permute.xlu0 %932
  %v935 = vadd.f32 %v925, %v933
  %v936 = vtanh.pop %v935
  %v937 = vmul.f32 %v919, %v936
  %s938 = scalar_lea.vmem [#allocation5], 16
  %939 = vst.msk [vmem:[%s938] sm:$0xff] %vm296, %v937
  %s940 = scalar_lea.vmem [#allocation5], 40
  %941 = vst.msk [vmem:[%s940] sm:$0xff] %vm696, %v937
  %s942 = smul.u32 3, 2
  %s943 = smul.addr %s942, 8
  %s944 = scalar_lea.vmem [#allocation4], %s943
  %v945 = vld [vmem:[%s944] sm:$0xff]
  %v946 = vld [vmem:[%s944 + $0x8] sm:$0xff]
  %s947 = smul.u32 4, 2
  %s948 = smul.addr %s947, 8
  %s949 = scalar_lea.vmem [#allocation4], %s948
  %v950 = vld [vmem:[%s949] sm:$0xff]
  %v951 = vld [vmem:[%s949 + $0x8] sm:$0xff]
  %v952 = vsel %vm585, %v945, %v950
  %v953 = vsel %vm586, %v946, %v951
  %v955 = vsel %vm275, %v937, 0
  %957 = vmatprep.subr.mxu0 0.0
  %958 = vmatpush1.msra.mxu0 0.0
  %959 = vmatprep.subr.mxu0 0.0
  %960 = vmatpush1.msra.mxu0 0.0
  %961 = vmatprep.subr.mxu0 0.0
  %962 = vmatpush1.msra.mxu0 0.0
  %963 = vmatprep.subr.mxu0 0.0
  %964 = vmatpush1.msra.mxu0 0.0
  %965 = vmatprep.subr.mxu0 0.0
  %966 = vmatpush1.msra.mxu0 0.0
  %967 = vmatprep.subr.mxu0 0.0
  %968 = vmatpush1.msra.mxu0 0.0
  %969 = vmatprep.subr.mxu0 0.0
  %970 = vmatpush1.msra.mxu0 0.0
  %971 = vmatprep.subr.mxu0 0.0
  %972 = vmatpush1.msra.mxu0 0.0
  %973 = vmatprep.subr.mxu0 %v555
  %974 = vmatpush1.msra.mxu0 %v554
  %975 = vmatprep.subr.mxu0 %v553
  %976 = vmatpush1.msra.mxu0 %v552
  %977 = vmatprep.subr.mxu0 %v551
  %978 = vmatpush1.msra.mxu0 %v550
  %979 = vmatprep.subr.mxu0 %v549
  %980 = vmatpush1.msra.mxu0 %v548
  %981 = vmatprep.subr.mxu0 %v547
  %982 = vmatpush1.msra.mxu0 %v546
  %983 = vmatprep.subr.mxu0 %v545
  %984 = vmatpush1.msra.mxu0 %v544
  %985 = vmatprep.subr.mxu0 %v543
  %986 = vmatpush1.msra.mxu0 %v542
  %987 = vmatprep.subr.mxu0 %v541
  %988 = vmatpush1.msra.mxu0 %v540
  %989 = vmatprep.subr.mxu0 0.0
  %990 = vmatpush2.msra.mxu0 0.0
  %991 = vmatprep.subr.mxu0 0.0
  %992 = vmatpush2.msra.mxu0 0.0
  %993 = vmatprep.subr.mxu0 0.0
  %994 = vmatpush2.msra.mxu0 0.0
  %995 = vmatprep.subr.mxu0 0.0
  %996 = vmatpush2.msra.mxu0 0.0
  %997 = vmatprep.subr.mxu0 0.0
  %998 = vmatpush2.msra.mxu0 0.0
  %999 = vmatprep.subr.mxu0 0.0
  %1000 = vmatpush2.msra.mxu0 0.0
  %1001 = vmatprep.subr.mxu0 0.0
  %1002 = vmatpush2.msra.mxu0 0.0
  %1003 = vmatprep.subr.mxu0 0.0
  %1004 = vmatpush2.msra.mxu0 0.0
  %1005 = vmatprep.subr.mxu0 0.0
  %1006 = vmatpush2.msra.mxu0 0.0
  %1007 = vmatprep.subr.mxu0 0.0
  %1008 = vmatpush2.msra.mxu0 0.0
  %1009 = vmatprep.subr.mxu0 0.0
  %1010 = vmatpush2.msra.mxu0 0.0
  %1011 = vmatprep.subr.mxu0 0.0
  %1012 = vmatpush2.msra.mxu0 0.0
  %1013 = vmatprep.subr.mxu0 0.0
  %1014 = vmatpush2.msra.mxu0 0.0
  %1015 = vmatprep.subr.mxu0 0.0
  %1016 = vmatpush2.msra.mxu0 0.0
  %1017 = vmatprep.subr.mxu0 0.0
  %1018 = vmatpush2.msra.mxu0 0.0
  %1019 = vmatprep.subr.mxu0 0.0
  %1020 = vmatpush2.msra.mxu0 0.0
  %1021 = vmatprep.mubr.f32.mxu0 0.0
  %1022 = vmatmul.mubr.f32.gmra.mxu0 %v955
  %v1023 = vpop.f32.mrf.mxu0
  %v1024 = vadd.f32 0.0, %v1023
  %v1025 = vpop.f32.mrf.mxu0
  %v1026 = vadd.f32 0.0, %v1025
  %1027 = vdwg.mxu0
  %v1028 = vadd.f32 %v952, %v1024
  %v1029 = vadd.f32 %v953, %v1026
  %v1030 = vxor.u32 %v1028, 2147483648
  %v1031 = vxor.u32 %v1029, 2147483648
  %v1032 = vmul.f32 %v1030, 1.442695
  %v1033 = vpow.pop %v1032
  %v1034 = vmul.f32 %v1031, 1.442695
  %v1035 = vpow.pop %v1034
  %v1036 = vadd.f32 %v1033, 1.0
  %v1037 = vadd.f32 %v1035, 1.0
  %v1038 = vrcp.pop %v1036
  %v1039 = vmul.f32 1.0, %v1038
  %v1040 = vrcp.pop %v1037
  %v1041 = vmul.f32 1.0, %v1040
  %v1042 = vtanh.pop %v1029
  %1044 = vrot.lane.b32.xlu0 %v1042, 64
  %v1045 = vpop.permute.xlu0 %1044
  %v1047 = vmul.f32 %v1039, %v1045
  %1049 = vrot.lane.b32.xlu0 %v935, 64
  %v1050 = vpop.permute.xlu0 %1049
  %v1052 = vmul.f32 %v1039, %v1050
  %1054 = vrot.lane.b32.xlu0 %v1052, 64
  %v1055 = vpop.permute.xlu0 %1054
  %v1057 = vadd.f32 %v1047, %v1055
  %v1058 = vtanh.pop %v1057
  %v1059 = vmul.f32 %v1041, %v1058
  %s1060 = scalar_lea.vmem [#allocation5], 24
  %1061 = vst.msk [vmem:[%s1060] sm:$0xff] %vm296, %v1059
  %s1062 = scalar_lea.vmem [#allocation5], 32
  %1063 = vst.msk [vmem:[%s1062] sm:$0xff] %vm696, %v1059
  %v1064 = vld [vmem:[%s949] sm:$0xff]
  %v1065 = vld [vmem:[%s949 + $0x8] sm:$0xff]
  %v1066 = vld [vmem:[%s944] sm:$0xff]
  %v1067 = vld [vmem:[%s944 + $0x8] sm:$0xff]
  %v1068 = vsel %vm585, %v1064, %v1066
  %v1069 = vsel %vm586, %v1065, %v1067
  %v1071 = vsel %vm275, %v1059, 0
  %1073 = vmatprep.subr.mxu0 0.0
  %1074 = vmatpush1.msra.mxu0 0.0
  %1075 = vmatprep.subr.mxu0 0.0
  %1076 = vmatpush1.msra.mxu0 0.0
  %1077 = vmatprep.subr.mxu0 0.0
  %1078 = vmatpush1.msra.mxu0 0.0
  %1079 = vmatprep.subr.mxu0 0.0
  %1080 = vmatpush1.msra.mxu0 0.0
  %1081 = vmatprep.subr.mxu0 0.0
  %1082 = vmatpush1.msra.mxu0 0.0
  %1083 = vmatprep.subr.mxu0 0.0
  %1084 = vmatpush1.msra.mxu0 0.0
  %1085 = vmatprep.subr.mxu0 0.0
  %1086 = vmatpush1.msra.mxu0 0.0
  %1087 = vmatprep.subr.mxu0 0.0
  %1088 = vmatpush1.msra.mxu0 0.0
  %1089 = vmatprep.subr.mxu0 %v555
  %1090 = vmatpush1.msra.mxu0 %v554
  %1091 = vmatprep.subr.mxu0 %v553
  %1092 = vmatpush1.msra.mxu0 %v552
  %1093 = vmatprep.subr.mxu0 %v551
  %1094 = vmatpush1.msra.mxu0 %v550
  %1095 = vmatprep.subr.mxu0 %v549
  %1096 = vmatpush1.msra.mxu0 %v548
  %1097 = vmatprep.subr.mxu0 %v547
  %1098 = vmatpush1.msra.mxu0 %v546
  %1099 = vmatprep.subr.mxu0 %v545
  %1100 = vmatpush1.msra.mxu0 %v544
  %1101 = vmatprep.subr.mxu0 %v543
  %1102 = vmatpush1.msra.mxu0 %v542
  %1103 = vmatprep.subr.mxu0 %v541
  %1104 = vmatpush1.msra.mxu0 %v540
  %1105 = vmatprep.subr.mxu0 0.0
  %1106 = vmatpush2.msra.mxu0 0.0
  %1107 = vmatprep.subr.mxu0 0.0
  %1108 = vmatpush2.msra.mxu0 0.0
  %1109 = vmatprep.subr.mxu0 0.0
  %1110 = vmatpush2.msra.mxu0 0.0
  %1111 = vmatprep.subr.mxu0 0.0
  %1112 = vmatpush2.msra.mxu0 0.0
  %1113 = vmatprep.subr.mxu0 0.0
  %1114 = vmatpush2.msra.mxu0 0.0
  %1115 = vmatprep.subr.mxu0 0.0
  %1116 = vmatpush2.msra.mxu0 0.0
  %1117 = vmatprep.subr.mxu0 0.0
  %1118 = vmatpush2.msra.mxu0 0.0
  %1119 = vmatprep.subr.mxu0 0.0
  %1120 = vmatpush2.msra.mxu0 0.0
  %1121 = vmatprep.subr.mxu0 0.0
  %1122 = vmatpush2.msra.mxu0 0.0
  %1123 = vmatprep.subr.mxu0 0.0
  %1124 = vmatpush2.msra.mxu0 0.0
  %1125 = vmatprep.subr.mxu0 0.0
  %1126 = vmatpush2.msra.mxu0 0.0
  %1127 = vmatprep.subr.mxu0 0.0
  %1128 = vmatpush2.msra.mxu0 0.0
  %1129 = vmatprep.subr.mxu0 0.0
  %1130 = vmatpush2.msra.mxu0 0.0
  %1131 = vmatprep.subr.mxu0 0.0
  %1132 = vmatpush2.msra.mxu0 0.0
  %1133 = vmatprep.subr.mxu0 0.0
  %1134 = vmatpush2.msra.mxu0 0.0
  %1135 = vmatprep.subr.mxu0 0.0
  %1136 = vmatpush2.msra.mxu0 0.0
  %1137 = vmatprep.mubr.f32.mxu0 0.0
  %1138 = vmatmul.mubr.f32.gmra.mxu0 %v1071
  %v1139 = vpop.f32.mrf.mxu0
  %v1140 = vadd.f32 0.0, %v1139
  %v1141 = vpop.f32.mrf.mxu0
  %v1142 = vadd.f32 0.0, %v1141
  %1143 = vdwg.mxu0
  %v1144 = vadd.f32 %v1068, %v1140
  %v1145 = vadd.f32 %v1069, %v1142
  %v1146 = vxor.u32 %v1144, 2147483648
  %v1147 = vxor.u32 %v1145, 2147483648
  %v1148 = vmul.f32 %v1146, 1.442695
  %v1149 = vpow.pop %v1148
  %v1150 = vmul.f32 %v1147, 1.442695
  %v1151 = vpow.pop %v1150
  %v1152 = vadd.f32 %v1149, 1.0
  %v1153 = vadd.f32 %v1151, 1.0
  %v1154 = vrcp.pop %v1152
  %v1155 = vmul.f32 1.0, %v1154
  %v1156 = vrcp.pop %v1153
  %v1157 = vmul.f32 1.0, %v1156
  %v1158 = vtanh.pop %v1145
  %1160 = vrot.lane.b32.xlu0 %v1158, 64
  %v1161 = vpop.permute.xlu0 %1160
  %v1163 = vmul.f32 %v1155, %v1161
  %1165 = vrot.lane.b32.xlu0 %v1057, 64
  %v1166 = vpop.permute.xlu0 %1165
  %v1168 = vmul.f32 %v1155, %v1166
  %1170 = vrot.lane.b32.xlu0 %v1168, 64
  %v1171 = vpop.permute.xlu0 %1170
  %v1173 = vadd.f32 %v1163, %v1171
  %v1174 = vtanh.pop %v1173
  %v1175 = vmul.f32 %v1157, %v1174
  %1176 = vst.msk [vmem:[%s1062] sm:$0xff] %vm296, %v1175
  %1177 = vst.msk [vmem:[%s1060] sm:$0xff] %vm696, %v1175
  %v1178 = vld [vmem:[%s827] sm:$0xff]
  %v1179 = vld [vmem:[%s827 + $0x8] sm:$0xff]
  %v1180 = vld [vmem:[%s822] sm:$0xff]
  %v1181 = vld [vmem:[%s822 + $0x8] sm:$0xff]
  %v1182 = vsel %vm585, %v1178, %v1180
  %v1183 = vsel %vm586, %v1179, %v1181
  %v1185 = vsel %vm275, %v1175, 0
  %1187 = vmatprep.subr.mxu0 0.0
  %1188 = vmatpush1.msra.mxu0 0.0
  %1189 = vmatprep.subr.mxu0 0.0
  %1190 = vmatpush1.msra.mxu0 0.0
  %1191 = vmatprep.subr.mxu0 0.0
  %1192 = vmatpush1.msra.mxu0 0.0
  %1193 = vmatprep.subr.mxu0 0.0
  %1194 = vmatpush1.msra.mxu0 0.0
  %1195 = vmatprep.subr.mxu0 0.0
  %1196 = vmatpush1.msra.mxu0 0.0
  %1197 = vmatprep.subr.mxu0 0.0
  %1198 = vmatpush1.msra.mxu0 0.0
  %1199 = vmatprep.subr.mxu0 0.0
  %1200 = vmatpush1.msra.mxu0 0.0
  %1201 = vmatprep.subr.mxu0 0.0
  %1202 = vmatpush1.msra.mxu0 0.0
  %1203 = vmatprep.subr.mxu0 %v555
  %1204 = vmatpush1.msra.mxu0 %v554
  %1205 = vmatprep.subr.mxu0 %v553
  %1206 = vmatpush1.msra.mxu0 %v552
  %1207 = vmatprep.subr.mxu0 %v551
  %1208 = vmatpush1.msra.mxu0 %v550
  %1209 = vmatprep.subr.mxu0 %v549
  %1210 = vmatpush1.msra.mxu0 %v548
  %1211 = vmatprep.subr.mxu0 %v547
  %1212 = vmatpush1.msra.mxu0 %v546
  %1213 = vmatprep.subr.mxu0 %v545
  %1214 = vmatpush1.msra.mxu0 %v544
  %1215 = vmatprep.subr.mxu0 %v543
  %1216 = vmatpush1.msra.mxu0 %v542
  %1217 = vmatprep.subr.mxu0 %v541
  %1218 = vmatpush1.msra.mxu0 %v540
  %1219 = vmatprep.subr.mxu0 0.0
  %1220 = vmatpush2.msra.mxu0 0.0
  %1221 = vmatprep.subr.mxu0 0.0
  %1222 = vmatpush2.msra.mxu0 0.0
  %1223 = vmatprep.subr.mxu0 0.0
  %1224 = vmatpush2.msra.mxu0 0.0
  %1225 = vmatprep.subr.mxu0 0.0
  %1226 = vmatpush2.msra.mxu0 0.0
  %1227 = vmatprep.subr.mxu0 0.0
  %1228 = vmatpush2.msra.mxu0 0.0
  %1229 = vmatprep.subr.mxu0 0.0
  %1230 = vmatpush2.msra.mxu0 0.0
  %1231 = vmatprep.subr.mxu0 0.0
  %1232 = vmatpush2.msra.mxu0 0.0
  %1233 = vmatprep.subr.mxu0 0.0
  %1234 = vmatpush2.msra.mxu0 0.0
  %1235 = vmatprep.subr.mxu0 0.0
  %1236 = vmatpush2.msra.mxu0 0.0
  %1237 = vmatprep.subr.mxu0 0.0
  %1238 = vmatpush2.msra.mxu0 0.0
  %1239 = vmatprep.subr.mxu0 0.0
  %1240 = vmatpush2.msra.mxu0 0.0
  %1241 = vmatprep.subr.mxu0 0.0
  %1242 = vmatpush2.msra.mxu0 0.0
  %1243 = vmatprep.subr.mxu0 0.0
  %1244 = vmatpush2.msra.mxu0 0.0
  %1245 = vmatprep.subr.mxu0 0.0
  %1246 = vmatpush2.msra.mxu0 0.0
  %1247 = vmatprep.subr.mxu0 0.0
  %1248 = vmatpush2.msra.mxu0 0.0
  %1249 = vmatprep.subr.mxu0 0.0
  %1250 = vmatpush2.msra.mxu0 0.0
  %1251 = vmatprep.mubr.f32.mxu0 0.0
  %1252 = vmatmul.mubr.f32.gmra.mxu0 %v1185
  %v1253 = vpop.f32.mrf.mxu0
  %v1254 = vadd.f32 0.0, %v1253
  %v1255 = vpop.f32.mrf.mxu0
  %v1256 = vadd.f32 0.0, %v1255
  %1257 = vdwg.mxu0
  %v1258 = vadd.f32 %v1182, %v1254
  %v1259 = vadd.f32 %v1183, %v1256
  %v1260 = vxor.u32 %v1258, 2147483648
  %v1261 = vxor.u32 %v1259, 2147483648
  %v1262 = vmul.f32 %v1260, 1.442695
  %v1263 = vpow.pop %v1262
  %v1264 = vmul.f32 %v1261, 1.442695
  %v1265 = vpow.pop %v1264
  %v1266 = vadd.f32 %v1263, 1.0
  %v1267 = vadd.f32 %v1265, 1.0
  %v1268 = vrcp.pop %v1266
  %v1269 = vmul.f32 1.0, %v1268
  %v1270 = vrcp.pop %v1267
  %v1271 = vmul.f32 1.0, %v1270
  %v1272 = vtanh.pop %v1259
  %1274 = vrot.lane.b32.xlu0 %v1272, 64
  %v1275 = vpop.permute.xlu0 %1274
  %v1277 = vmul.f32 %v1269, %v1275
  %1279 = vrot.lane.b32.xlu0 %v1173, 64
  %v1280 = vpop.permute.xlu0 %1279
  %v1282 = vmul.f32 %v1269, %v1280
  %1284 = vrot.lane.b32.xlu0 %v1282, 64
  %v1285 = vpop.permute.xlu0 %1284
  %v1287 = vadd.f32 %v1277, %v1285
  %v1288 = vtanh.pop %v1287
  %v1289 = vmul.f32 %v1271, %v1288
  %1290 = vst.msk [vmem:[%s940] sm:$0xff] %vm296, %v1289
  %1291 = vst.msk [vmem:[%s938] sm:$0xff] %vm696, %v1289
  %v1292 = vld [vmem:[%s705] sm:$0xff]
  %v1293 = vld [vmem:[%s705 + $0x8] sm:$0xff]
  %v1294 = vld [vmem:[%s700] sm:$0xff]
  %v1295 = vld [vmem:[%s700 + $0x8] sm:$0xff]
  %v1296 = vsel %vm585, %v1292, %v1294
  %v1297 = vsel %vm586, %v1293, %v1295
  %v1299 = vsel %vm275, %v1289, 0
  %1301 = vmatprep.subr.mxu0 0.0
  %1302 = vmatpush1.msra.mxu0 0.0
  %1303 = vmatprep.subr.mxu0 0.0
  %1304 = vmatpush1.msra.mxu0 0.0
  %1305 = vmatprep.subr.mxu0 0.0
  %1306 = vmatpush1.msra.mxu0 0.0
  %1307 = vmatprep.subr.mxu0 0.0
  %1308 = vmatpush1.msra.mxu0 0.0
  %1309 = vmatprep.subr.mxu0 0.0
  %1310 = vmatpush1.msra.mxu0 0.0
  %1311 = vmatprep.subr.mxu0 0.0
  %1312 = vmatpush1.msra.mxu0 0.0
  %1313 = vmatprep.subr.mxu0 0.0
  %1314 = vmatpush1.msra.mxu0 0.0
  %1315 = vmatprep.subr.mxu0 0.0
  %1316 = vmatpush1.msra.mxu0 0.0
  %1317 = vmatprep.subr.mxu0 %v555
  %1318 = vmatpush1.msra.mxu0 %v554
  %1319 = vmatprep.subr.mxu0 %v553
  %1320 = vmatpush1.msra.mxu0 %v552
  %1321 = vmatprep.subr.mxu0 %v551
  %1322 = vmatpush1.msra.mxu0 %v550
  %1323 = vmatprep.subr.mxu0 %v549
  %1324 = vmatpush1.msra.mxu0 %v548
  %1325 = vmatprep.subr.mxu0 %v547
  %1326 = vmatpush1.msra.mxu0 %v546
  %1327 = vmatprep.subr.mxu0 %v545
  %1328 = vmatpush1.msra.mxu0 %v544
  %1329 = vmatprep.subr.mxu0 %v543
  %1330 = vmatpush1.msra.mxu0 %v542
  %1331 = vmatprep.subr.mxu0 %v541
  %1332 = vmatpush1.msra.mxu0 %v540
  %1333 = vmatprep.subr.mxu0 0.0
  %1334 = vmatpush2.msra.mxu0 0.0
  %1335 = vmatprep.subr.mxu0 0.0
  %1336 = vmatpush2.msra.mxu0 0.0
  %1337 = vmatprep.subr.mxu0 0.0
  %1338 = vmatpush2.msra.mxu0 0.0
  %1339 = vmatprep.subr.mxu0 0.0
  %1340 = vmatpush2.msra.mxu0 0.0
  %1341 = vmatprep.subr.mxu0 0.0
  %1342 = vmatpush2.msra.mxu0 0.0
  %1343 = vmatprep.subr.mxu0 0.0
  %1344 = vmatpush2.msra.mxu0 0.0
  %1345 = vmatprep.subr.mxu0 0.0
  %1346 = vmatpush2.msra.mxu0 0.0
  %1347 = vmatprep.subr.mxu0 0.0
  %1348 = vmatpush2.msra.mxu0 0.0
  %1349 = vmatprep.subr.mxu0 0.0
  %1350 = vmatpush2.msra.mxu0 0.0
  %1351 = vmatprep.subr.mxu0 0.0
  %1352 = vmatpush2.msra.mxu0 0.0
  %1353 = vmatprep.subr.mxu0 0.0
  %1354 = vmatpush2.msra.mxu0 0.0
  %1355 = vmatprep.subr.mxu0 0.0
  %1356 = vmatpush2.msra.mxu0 0.0
  %1357 = vmatprep.subr.mxu0 0.0
  %1358 = vmatpush2.msra.mxu0 0.0
  %1359 = vmatprep.subr.mxu0 0.0
  %1360 = vmatpush2.msra.mxu0 0.0
  %1361 = vmatprep.subr.mxu0 0.0
  %1362 = vmatpush2.msra.mxu0 0.0
  %1363 = vmatprep.subr.mxu0 0.0
  %1364 = vmatpush2.msra.mxu0 0.0
  %1365 = vmatprep.mubr.f32.mxu0 0.0
  %1366 = vmatmul.mubr.f32.gmra.mxu0 %v1299
  %v1367 = vpop.f32.mrf.mxu0
  %v1368 = vadd.f32 0.0, %v1367
  %v1369 = vpop.f32.mrf.mxu0
  %v1370 = vadd.f32 0.0, %v1369
  %1371 = vdwg.mxu0
  %v1372 = vadd.f32 %v1296, %v1368
  %v1373 = vadd.f32 %v1297, %v1370
  %v1374 = vxor.u32 %v1372, 2147483648
  %v1375 = vxor.u32 %v1373, 2147483648
  %v1376 = vmul.f32 %v1374, 1.442695
  %v1377 = vpow.pop %v1376
  %v1378 = vmul.f32 %v1375, 1.442695
  %v1379 = vpow.pop %v1378
  %v1380 = vadd.f32 %v1377, 1.0
  %v1381 = vadd.f32 %v1379, 1.0
  %v1382 = vrcp.pop %v1380
  %v1383 = vmul.f32 1.0, %v1382
  %v1384 = vrcp.pop %v1381
  %v1385 = vmul.f32 1.0, %v1384
  %v1386 = vtanh.pop %v1373
  %1388 = vrot.lane.b32.xlu0 %v1386, 64
  %v1389 = vpop.permute.xlu0 %1388
  %v1391 = vmul.f32 %v1383, %v1389
  %1393 = vrot.lane.b32.xlu0 %v1287, 64
  %v1394 = vpop.permute.xlu0 %1393
  %v1396 = vmul.f32 %v1383, %v1394
  %1398 = vrot.lane.b32.xlu0 %v1396, 64
  %v1399 = vpop.permute.xlu0 %1398
  %v1401 = vadd.f32 %v1391, %v1399
  %v1402 = vtanh.pop %v1401
  %v1403 = vmul.f32 %v1385, %v1402
  %1404 = vst.msk [vmem:[%s818] sm:$0xff] %vm296, %v1403
  %1405 = vst.msk [vmem:[%s816] sm:$0xff] %vm696, %v1403
  %v1406 = vld [vmem:[%s573] sm:$0xff]
  %v1407 = vld [vmem:[%s573 + $0x8] sm:$0xff]
  %v1408 = vld [vmem:[%s568] sm:$0xff]
  %v1409 = vld [vmem:[%s568 + $0x8] sm:$0xff]
  %v1410 = vsel %vm585, %v1406, %v1408
  %v1411 = vsel %vm586, %v1407, %v1409
  %v1413 = vsel %vm275, %v1403, 0
  %1415 = vmatprep.subr.mxu0 0.0
  %1416 = vmatpush1.msra.mxu0 0.0
  %1417 = vmatprep.subr.mxu0 0.0
  %1418 = vmatpush1.msra.mxu0 0.0
  %1419 = vmatprep.subr.mxu0 0.0
  %1420 = vmatpush1.msra.mxu0 0.0
  %1421 = vmatprep.subr.mxu0 0.0
  %1422 = vmatpush1.msra.mxu0 0.0
  %1423 = vmatprep.subr.mxu0 0.0
  %1424 = vmatpush1.msra.mxu0 0.0
  %1425 = vmatprep.subr.mxu0 0.0
  %1426 = vmatpush1.msra.mxu0 0.0
  %1427 = vmatprep.subr.mxu0 0.0
  %1428 = vmatpush1.msra.mxu0 0.0
  %1429 = vmatprep.subr.mxu0 0.0
  %1430 = vmatpush1.msra.mxu0 0.0
  %1431 = vmatprep.subr.mxu0 %v555
  %1432 = vmatpush1.msra.mxu0 %v554
  %1433 = vmatprep.subr.mxu0 %v553
  %1434 = vmatpush1.msra.mxu0 %v552
  %1435 = vmatprep.subr.mxu0 %v551
  %1436 = vmatpush1.msra.mxu0 %v550
  %1437 = vmatprep.subr.mxu0 %v549
  %1438 = vmatpush1.msra.mxu0 %v548
  %1439 = vmatprep.subr.mxu0 %v547
  %1440 = vmatpush1.msra.mxu0 %v546
  %1441 = vmatprep.subr.mxu0 %v545
  %1442 = vmatpush1.msra.mxu0 %v544
  %1443 = vmatprep.subr.mxu0 %v543
  %1444 = vmatpush1.msra.mxu0 %v542
  %1445 = vmatprep.subr.mxu0 %v541
  %1446 = vmatpush1.msra.mxu0 %v540
  %1447 = vmatprep.subr.mxu0 0.0
  %1448 = vmatpush2.msra.mxu0 0.0
  %1449 = vmatprep.subr.mxu0 0.0
  %1450 = vmatpush2.msra.mxu0 0.0
  %1451 = vmatprep.subr.mxu0 0.0
  %1452 = vmatpush2.msra.mxu0 0.0
  %1453 = vmatprep.subr.mxu0 0.0
  %1454 = vmatpush2.msra.mxu0 0.0
  %1455 = vmatprep.subr.mxu0 0.0
  %1456 = vmatpush2.msra.mxu0 0.0
  %1457 = vmatprep.subr.mxu0 0.0
  %1458 = vmatpush2.msra.mxu0 0.0
  %1459 = vmatprep.subr.mxu0 0.0
  %1460 = vmatpush2.msra.mxu0 0.0
  %1461 = vmatprep.subr.mxu0 0.0
  %1462 = vmatpush2.msra.mxu0 0.0
  %1463 = vmatprep.subr.mxu0 0.0
  %1464 = vmatpush2.msra.mxu0 0.0
  %1465 = vmatprep.subr.mxu0 0.0
  %1466 = vmatpush2.msra.mxu0 0.0
  %1467 = vmatprep.subr.mxu0 0.0
  %1468 = vmatpush2.msra.mxu0 0.0
  %1469 = vmatprep.subr.mxu0 0.0
  %1470 = vmatpush2.msra.mxu0 0.0
  %1471 = vmatprep.subr.mxu0 0.0
  %1472 = vmatpush2.msra.mxu0 0.0
  %1473 = vmatprep.subr.mxu0 0.0
  %1474 = vmatpush2.msra.mxu0 0.0
  %1475 = vmatprep.subr.mxu0 0.0
  %1476 = vmatpush2.msra.mxu0 0.0
  %1477 = vmatprep.subr.mxu0 0.0
  %1478 = vmatpush2.msra.mxu0 0.0
  %1479 = vmatprep.mubr.f32.mxu0 0.0
  %1480 = vmatmul.mubr.f32.gmra.mxu0 %v1413
  %v1481 = vpop.f32.mrf.mxu0
  %v1482 = vadd.f32 0.0, %v1481
  %v1483 = vpop.f32.mrf.mxu0
  %v1484 = vadd.f32 0.0, %v1483
  %1485 = vdwg.mxu0
  %v1486 = vadd.f32 %v1410, %v1482
  %v1487 = vadd.f32 %v1411, %v1484
  %v1488 = vxor.u32 %v1486, 2147483648
  %v1489 = vxor.u32 %v1487, 2147483648
  %v1490 = vmul.f32 %v1488, 1.442695
  %v1491 = vpow.pop %v1490
  %v1492 = vmul.f32 %v1489, 1.442695
  %v1493 = vpow.pop %v1492
  %v1494 = vadd.f32 %v1491, 1.0
  %v1495 = vadd.f32 %v1493, 1.0
  %v1496 = vrcp.pop %v1494
  %v1497 = vmul.f32 1.0, %v1496
  %v1498 = vrcp.pop %v1495
  %v1499 = vmul.f32 1.0, %v1498
  %v1500 = vtanh.pop %v1487
  %1502 = vrot.lane.b32.xlu0 %v1500, 64
  %v1503 = vpop.permute.xlu0 %1502
  %v1505 = vmul.f32 %v1497, %v1503
  %1507 = vrot.lane.b32.xlu0 %v1401, 64
  %v1508 = vpop.permute.xlu0 %1507
  %v1510 = vmul.f32 %v1497, %v1508
  %1512 = vrot.lane.b32.xlu0 %v1510, 64
  %v1513 = vpop.permute.xlu0 %1512
  %v1515 = vadd.f32 %v1505, %v1513
  %v1516 = vtanh.pop %v1515
  %v1517 = vmul.f32 %v1499, %v1516
  %1518 = vst.msk [vmem:[%s695] sm:$0xff] %vm296, %v1517
  %1519 = vst.msk [vmem:[#allocation5] sm:$0xff] %vm696, %v1517
  %v1520 = vld [vmem:[#allocation5] sm:$0xff]
  %v1521 = vld [vmem:[#allocation5 + $0x8] sm:$0xff]
  %v1522 = vld [vmem:[#allocation5 + $0x10] sm:$0xff]
  %v1523 = vld [vmem:[#allocation5 + $0x18] sm:$0xff]
  %v1524 = vld [vmem:[#allocation5 + $0x20] sm:$0xff]
  %v1525 = vld [vmem:[#allocation5 + $0x28] sm:$0xff]
  %v1526 = vld [vmem:[#allocation5 + $0x30] sm:$0xff]
  %v1527 = vld [vmem:[#allocation5 + $0x38] sm:$0xff]
  %v1528 = vld [vmem:[%s8] sm:$0xff]
  %v1529 = vld [vmem:[%s8 + $0x8] sm:$0xff]
  %v1530 = vld [vmem:[%s8 + $0x10] sm:$0xff]
  %v1531 = vld [vmem:[%s8 + $0x18] sm:$0xff]
  %v1532 = vld [vmem:[%s8 + $0x20] sm:$0xff]
  %v1533 = vld [vmem:[%s8 + $0x28] sm:$0xff]
  %v1534 = vld [vmem:[%s8 + $0x30] sm:$0xff]
  %v1535 = vld [vmem:[%s8 + $0x38] sm:$0xff]
  %v1536 = vmul.f32 %v1520, %v1528
  %v1537 = vmul.f32 %v1521, %v1529
  %v1538 = vmul.f32 %v1522, %v1530
  %v1539 = vmul.f32 %v1523, %v1531
  %v1540 = vmul.f32 %v1524, %v1532
  %v1541 = vmul.f32 %v1525, %v1533
  %v1542 = vmul.f32 %v1526, %v1534
  %v1543 = vmul.f32 %v1527, %v1535
  %v1544 = vsel %vm275, %v1536, 0.0
  %v1545 = vsel %vm275, %v1537, 0.0
  %v1546 = vadd.f32 %v1544, %v1545
  %v1547 = vsel %vm275, %v1538, 0.0
  %v1548 = vadd.f32 %v1546, %v1547
  %v1549 = vsel %vm275, %v1539, 0.0
  %v1550 = vadd.f32 %v1548, %v1549
  %v1551 = vsel %vm275, %v1540, 0.0
  %v1552 = vadd.f32 %v1550, %v1551
  %v1553 = vsel %vm275, %v1541, 0.0
  %v1554 = vadd.f32 %v1552, %v1553
  %v1555 = vsel %vm275, %v1542, 0.0
  %v1556 = vadd.f32 %v1554, %v1555
  %v1557 = vsel %vm275, %v1543, 0.0
  %v1558 = vadd.f32 %v1556, %v1557
  %v1559 = vrot.slane %v1558, 4
  %v1560 = vadd.f32 %v1558, %v1559
  %v1561 = vrot.slane %v1560, 2
  %v1562 = vadd.f32 %v1560, %v1561
  %v1563 = vrot.slane %v1562, 1
  %v1564 = vadd.f32 %v1562, %v1563
  %v1565 = vmul.f32 %v1564, 0.0625
  %v1566 = vsub.f32 %v1520, %v1565
  %v1567 = vsub.f32 %v1521, %v1565
  %v1568 = vsub.f32 %v1522, %v1565
  %v1569 = vsub.f32 %v1523, %v1565
  %v1570 = vsub.f32 %v1524, %v1565
  %v1571 = vsub.f32 %v1525, %v1565
  %v1572 = vsub.f32 %v1526, %v1565
  %v1573 = vsub.f32 %v1527, %v1565
  %v1574 = vmul.f32 %v1566, %v1528
  %v1575 = vmul.f32 %v1567, %v1529
  %v1576 = vmul.f32 %v1568, %v1530
  %v1577 = vmul.f32 %v1569, %v1531
  %v1578 = vmul.f32 %v1570, %v1532
  %v1579 = vmul.f32 %v1571, %v1533
  %v1580 = vmul.f32 %v1572, %v1534
  %v1581 = vmul.f32 %v1573, %v1535
  %v1582 = vmul.f32 %v1574, %v1574
  %v1583 = vmul.f32 %v1575, %v1575
  %v1584 = vmul.f32 %v1576, %v1576
  %v1585 = vmul.f32 %v1577, %v1577
  %v1586 = vmul.f32 %v1578, %v1578
  %v1587 = vmul.f32 %v1579, %v1579
  %v1588 = vmul.f32 %v1580, %v1580
  %v1589 = vmul.f32 %v1581, %v1581
  %v1590 = vsel %vm275, %v1582, 0.0
  %v1591 = vsel %vm275, %v1583, 0.0
  %v1592 = vadd.f32 %v1590, %v1591
  %v1593 = vsel %vm275, %v1584, 0.0
  %v1594 = vadd.f32 %v1592, %v1593
  %v1595 = vsel %vm275, %v1585, 0.0
  %v1596 = vadd.f32 %v1594, %v1595
  %v1597 = vsel %vm275, %v1586, 0.0
  %v1598 = vadd.f32 %v1596, %v1597
  %v1599 = vsel %vm275, %v1587, 0.0
  %v1600 = vadd.f32 %v1598, %v1599
  %v1601 = vsel %vm275, %v1588, 0.0
  %v1602 = vadd.f32 %v1600, %v1601
  %v1603 = vsel %vm275, %v1589, 0.0
  %v1604 = vadd.f32 %v1602, %v1603
  %v1605 = vrot.slane %v1604, 4
  %v1606 = vadd.f32 %v1604, %v1605
  %v1607 = vrot.slane %v1606, 2
  %v1608 = vadd.f32 %v1606, %v1607
  %v1609 = vrot.slane %v1608, 1
  %v1610 = vadd.f32 %v1608, %v1609
  %v1611 = vmul.f32 %v1610, 0.0625
  %v1612 = vadd.f32 %v1611, 1e-05
  %v1613 = vrsqrt.pop %v1612
  %v1614 = vmul.f32 %v1566, %v1613
  %v1615 = vmul.f32 %v1567, %v1613
  %v1616 = vmul.f32 %v1568, %v1613
  %v1617 = vmul.f32 %v1569, %v1613
  %v1618 = vmul.f32 %v1570, %v1613
  %v1619 = vmul.f32 %v1571, %v1613
  %v1620 = vmul.f32 %v1572, %v1613
  %v1621 = vmul.f32 %v1573, %v1613
  %v1622 = vpack.c.bf16 %v1615, %v1614
  %v1623 = vpack.c.bf16 %v1617, %v1616
  %v1624 = vpack.c.bf16 %v1619, %v1618
  %v1625 = vpack.c.bf16 %v1621, %v1620
  %v1626 = vld [vmem:[%s9] sm:$0xf]
  %v1627 = vld [vmem:[%s9 + $0x4] sm:$0xf]
  %v1628 = vld [vmem:[%s9 + $0x8] sm:$0xf]
  %v1629 = vld [vmem:[%s9 + $0xc] sm:$0xf]
  %v1630 = vld [vmem:[%s9 + $0x10] sm:$0xf]
  %v1631 = vld [vmem:[%s9 + $0x14] sm:$0xf]
  %v1632 = vld [vmem:[%s9 + $0x18] sm:$0xf]
  %v1633 = vld [vmem:[%s9 + $0x1c] sm:$0xf]
  %v1642 = vunpack.c.l.b16 %v1626
  %v1643 = vunpack.c.l.b16 %v1627
  %v1644 = vunpack.c.l.b16 %v1628
  %v1645 = vunpack.c.l.b16 %v1629
  %v1646 = vunpack.c.l.b16 %v1630
  %v1647 = vunpack.c.l.b16 %v1631
  %v1648 = vunpack.c.l.b16 %v1632
  %v1649 = vunpack.c.l.b16 %v1633
  %v1650 = vpack.c.b16 %v1643, %v1642
  %v1651 = vpack.c.b16 %v1645, %v1644
  %v1652 = vpack.c.b16 %v1647, %v1646
  %v1653 = vpack.c.b16 %v1649, %v1648
  %v1659 = vsel %vm275, %v1622, 0
  %v1662 = vsel %vm275, %v1623, 0
  %v1665 = vsel %vm275, %v1624, 0
  %v1668 = vsel %vm275, %v1625, 0
  %1670 = vmatprep.subr.bf16.mxu0 0
  %1671 = vmatpush1.bf16.msra.mxu0 0
  %1672 = vmatprep.subr.bf16.mxu0 0
  %1673 = vmatpush1.bf16.msra.mxu0 0
  %1674 = vmatprep.subr.bf16.mxu0 0
  %1675 = vmatpush1.bf16.msra.mxu0 0
  %1676 = vmatprep.subr.bf16.mxu0 0
  %1677 = vmatpush1.bf16.msra.mxu0 0
  %1678 = vmatprep.subr.bf16.mxu0 0
  %1679 = vmatpush1.bf16.msra.mxu0 %v1653
  %1680 = vmatprep.subr.bf16.mxu0 0
  %1681 = vmatpush1.bf16.msra.mxu0 %v1652
  %1682 = vmatprep.subr.bf16.mxu0 0
  %1683 = vmatpush1.bf16.msra.mxu0 %v1651
  %1684 = vmatprep.subr.bf16.mxu0 0
  %1685 = vmatpush1.bf16.msra.mxu0 %v1650
  %1686 = vmatprep.subr.bf16.mxu0 0
  %1687 = vmatpush2.bf16.msra.mxu0 0
  %1688 = vmatprep.subr.bf16.mxu0 0
  %1689 = vmatpush2.bf16.msra.mxu0 0
  %1690 = vmatprep.subr.bf16.mxu0 0
  %1691 = vmatpush2.bf16.msra.mxu0 0
  %1692 = vmatprep.subr.bf16.mxu0 0
  %1693 = vmatpush2.bf16.msra.mxu0 0
  %1694 = vmatprep.subr.bf16.mxu0 0
  %1695 = vmatpush2.bf16.msra.mxu0 0
  %1696 = vmatprep.subr.bf16.mxu0 0
  %1697 = vmatpush2.bf16.msra.mxu0 0
  %1698 = vmatprep.subr.bf16.mxu0 0
  %1699 = vmatpush2.bf16.msra.mxu0 0
  %1700 = vmatprep.subr.bf16.mxu0 0
  %1701 = vmatpush2.bf16.msra.mxu0 0
  %1702 = vmatprep.mubr.bf16.mxu0 0
  %1703 = vmatmul.mubr.bf16.gmra.mxu0 %v1659
  %v1704 = vpop.f32.mrf.mxu0
  %v1705 = vadd.f32 0.0, %v1704
  %v1706 = vpop.f32.mrf.mxu0
  %v1707 = vpop.f32.mrf.mxu0
  %v1708 = vadd.f32 0.0, %v1707
  %v1709 = vpop.f32.mrf.mxu0
  %1710 = vmatprep.mubr.bf16.mxu0 0
  %1711 = vmatmul.mubr.bf16.gmra.mxu0 %v1662
  %v1712 = vpop.f32.mrf.mxu0
  %v1713 = vadd.f32 0.0, %v1712
  %v1714 = vpop.f32.mrf.mxu0
  %v1715 = vpop.f32.mrf.mxu0
  %v1716 = vadd.f32 0.0, %v1715
  %v1717 = vpop.f32.mrf.mxu0
  %1718 = vmatprep.mubr.bf16.mxu0 0
  %1719 = vmatmul.mubr.bf16.gmra.mxu0 %v1665
  %v1720 = vpop.f32.mrf.mxu0
  %v1721 = vadd.f32 0.0, %v1720
  %v1722 = vpop.f32.mrf.mxu0
  %v1723 = vpop.f32.mrf.mxu0
  %v1724 = vadd.f32 0.0, %v1723
  %v1725 = vpop.f32.mrf.mxu0
  %1726 = vmatprep.mubr.bf16.mxu0 0
  %1727 = vmatmul.mubr.bf16.gmra.mxu0 %v1668
  %v1728 = vpop.f32.mrf.mxu0
  %v1729 = vadd.f32 0.0, %v1728
  %v1730 = vpop.f32.mrf.mxu0
  %v1731 = vpop.f32.mrf.mxu0
  %v1732 = vadd.f32 0.0, %v1731
  %v1733 = vpop.f32.mrf.mxu0
  %1734 = vdwg.mxu0
  %1735 = vst [vmem:[%s10] sm:$0xff] %v1705
  %1736 = vst [vmem:[%s10 + $0x8] sm:$0xff] %v1708
  %1737 = vst [vmem:[%s10 + $0x10] sm:$0xff] %v1713
  %1738 = vst [vmem:[%s10 + $0x18] sm:$0xff] %v1716
  %1739 = vst [vmem:[%s10 + $0x20] sm:$0xff] %v1721
  %1740 = vst [vmem:[%s10 + $0x28] sm:$0xff] %v1724
  %1741 = vst [vmem:[%s10 + $0x30] sm:$0xff] %v1729
  %1742 = vst [vmem:[%s10 + $0x38] sm:$0xff] %v1732
  // Predicated region
  $region42: #{sparnet_lstm_forward.1} parent=0 // pred_check
    _
  $region43: #{sparnet_lstm_forward.1} parent=0 // pred_check_branch
    %1744 = sbr.rel (0) target = $region45
  $region44: #{sparnet_lstm_forward.1} parent=0 // pred_region
    _
  $region45: #{sparnet_lstm_forward.1} parent=0 // pred_fallthru
    _
  // Predicated region
  $region46: #{sparnet_lstm_forward.1} parent=0 // pred_check
    _
  $region47: #{sparnet_lstm_forward.1} parent=0 // pred_check_branch
    %1746 = sbr.rel (0) target = $region49
  $region48: #{sparnet_lstm_forward.1} parent=0 // pred_region
    _
  $region49: #{sparnet_lstm_forward.1} parent=0 // pred_fallthru
    _

</llo_original>
